<compile_context>
chip_gen: v7x
topology: tpu7x:2x2x1
jax: 0.10.0
libtpu: 0.0.40
codegen_flags: <defaults>
</compile_context>

<pallas_src>
import jax
import jax.numpy as jnp
from jax.experimental import pallas as pl
from jax.experimental.pallas import tpu as pltpu

H = W = 7            # DoubleNet hard-codes the 7x7 spatial view
HW = H * W           # 49 real spatial positions
S_PAD = 64           # 49 padded up to a multiple of the bf16 sublane pack (16)
LANE = 128           # vreg lane width


def doublenet_kernel(x_ref, y_ref, w_ref, b_ref, out_ref):
    # x_ref/y_ref: (TB, 64, Cin) bf16     w_ref: (Cin, 2*Coutp) bf16 = [W1 | Wt]
    # b_ref: (1, Coutp) f32               out_ref: (TB, 4*Coutp) f32
    TB, S, Cin = x_ref.shape
    Coutp = b_ref.shape[-1]
    n = TB * S

    w = w_ref[...]
    # Two MXU matmuls against the same stationary fused RHS -- no sublane
    # concat of the LHS tiles, so no extra VMEM copy of x/y and half the LHS
    # live footprint.  bt cancels in t1 - t2 and never appears.
    zx = jnp.dot(x_ref[...].reshape(n, Cin), w,
                 preferred_element_type=jnp.float32)               # (n, 2*Coutp)
    zy = jnp.dot(y_ref[...].reshape(n, Cin), w,
                 preferred_element_type=jnp.float32)

    # Coutp is a multiple of 128 -> lane-aligned slices; S is a multiple of the
    # sublane pack -> the reshapes are free relabels.
    cx = zx[:, :Coutp].reshape(TB, S, Coutp)                       # x @ W1 (no bias)
    tx = zx[:, Coutp:].reshape(TB, S, Coutp)                       # x @ Wt
    cy = zy[:, :Coutp].reshape(TB, S, Coutp)                       # y @ W1
    ty = zy[:, Coutp:].reshape(TB, S, Coutp)                       # y @ Wt

    b = b_ref[...]                                                 # (1, Coutp)
    wxy = jnp.abs(tx - ty)        # == |t1 - t2|; zero on padded rows/columns
    inv = jnp.float32(1.0 / HW)   # pools divide by 49 (padded rows are zero)

    # fea = mean(x@W1) + b
    # res = mean((x@W1 + b) * wxy) = mean(cx*wxy) + b * mean(wxy)
    #   (bias factored out of the big (TB,S,Coutp) tensors)
    swxy = wxy.sum(axis=1) * inv                                   # (TB, Coutp)
    bsw = b * swxy
    fea1 = cx.sum(axis=1) * inv + b
    fea2 = cy.sum(axis=1) * inv + b
    res1 = (cx * wxy).sum(axis=1) * inv + bsw
    res2 = (cy * wxy).sum(axis=1) * inv + bsw

    out_ref[...] = jnp.concatenate([fea1, fea2, res1, res2], axis=-1)


def _vmem_capacity_bytes():
    """Physical per-core VMEM; conservative 64 MiB (v7x) if the query fails."""
    try:
        cap = getattr(pltpu.get_tpu_info(), "vmem_capacity_bytes", None)
        if cap:
            return int(cap)
    except Exception:
        pass
    return 64 << 20


def _per_step_vmem_bytes(tb, cin, coutp):
    in_bytes = 2 * 2 * tb * S_PAD * cin * 2        # x,y tiles, double-buffered, bf16
    w_bytes = cin * 2 * coutp * 2                  # fused weight, single-buffered, bf16
    b_bytes = coutp * 4                            # bias, f32
    out_bytes = 2 * tb * 4 * coutp * 4             # output tile, double-buffered, f32
    act_bytes = 3 * tb * S_PAD * 2 * coutp * 4     # zx/zy + elementwise temporaries
    return in_bytes + w_bytes + b_bytes + out_bytes + act_bytes


def _pick_tb(batch, cin, coutp, budget):
    """Largest batch tile that divides B and fits the VMEM budget."""
    for tb in (128, 64, 32, 16, 8):
        if batch % tb == 0 and _per_step_vmem_bytes(tb, cin, coutp) <= budget:
            return tb
    return batch      # tiny / indivisible batches: single tile


def _call_pallas(x_p, y_p, wcat, bias, tb, vmem_limit, single_buffer_params):
    B, _, Cin = x_p.shape
    Coutp = bias.shape[-1]
    param_kw = {}
    if single_buffer_params:
        # [W1|Wt] and b never change across the grid -> one VMEM buffer each.
        param_kw = dict(pipeline_mode=pl.Buffered(1))
    return pl.pallas_call(
        doublenet_kernel,
        out_shape=jax.ShapeDtypeStruct((B, 4 * Coutp), jnp.float32),
        grid=(B // tb,),
        in_specs=[
            pl.BlockSpec((tb, S_PAD, Cin), lambda i: (i, 0, 0)),        # x tile
            pl.BlockSpec((tb, S_PAD, Cin), lambda i: (i, 0, 0)),        # y tile
            pl.BlockSpec((Cin, 2 * Coutp), lambda i: (0, 0), **param_kw),  # [W1|Wt]
            pl.BlockSpec((1, Coutp), lambda i: (0, 0), **param_kw),        # b1
        ],
        out_specs=pl.BlockSpec((tb, 4 * Coutp), lambda i: (i, 0)),
        compiler_params=pltpu.CompilerParams(
            dimension_semantics=("parallel",),
            vmem_limit_bytes=vmem_limit),
    )(x_p, y_p, wcat, bias)


def doublenet_forward(x_nchw, y_nchw, w1, b1, wt, bt):
    """x_nchw, y_nchw: (B, Cin, 7, 7) NCHW; w1/wt: (Cin, Cout); b1/bt: (Cout,)."""
    del bt  # cancels in |t1 - t2|; never needed
    B, Cin, h, w = x_nchw.shape
    assert (h, w) == (H, W)
    Cout = w1.shape[1]
    Coutp = -(-Cout // LANE) * LANE      # lane-pad Cout to a multiple of 128

    # NCHW -> (B, 49, Cin), cast to bf16, zero-pad 49 -> 64.  The transpose,
    # cast and pad fuse into a single XLA pass per input that reads f32 and
    # writes half the bytes (bf16).
    def prep(a):
        a = jnp.transpose(a.reshape(B, Cin, HW), (0, 2, 1)).astype(jnp.bfloat16)
        return jnp.pad(a, ((0, 0), (0, S_PAD - HW), (0, 0)))

    x_p = prep(x_nchw)
    y_p = prep(y_nchw)

    # Fused, lane-padded weights [W1 | Wt] (bf16) and zero-padded bias (f32).
    pad_c = ((0, 0), (0, Coutp - Cout))
    wcat = jnp.concatenate(
        [jnp.pad(w1, pad_c), jnp.pad(wt, pad_c)], axis=1).astype(jnp.bfloat16)
    bias = jnp.pad(b1.reshape(1, Cout),
                   ((0, 0), (0, Coutp - Cout))).astype(jnp.float32)

    cap = _vmem_capacity_bytes()
    tb = _pick_tb(B, Cin, Coutp, budget=int(0.45 * cap))
    est = _per_step_vmem_bytes(tb, Cin, Coutp)
    vmem_limit = int(min(0.9 * cap, max(32 << 20, 2 * est)))

    try:
        out = _call_pallas(x_p, y_p, wcat, bias, tb, vmem_limit,
                           single_buffer_params=True)
    except Exception:
        # jax version without BlockSpec(pipeline_mode=pl.Buffered(...)):
        # fall back to default double-buffering of the grid-invariant blocks.
        out = _call_pallas(x_p, y_p, wcat, bias, tb, vmem_limit,
                           single_buffer_params=False)

    fea1 = out[:, 0 * Coutp:0 * Coutp + Cout]
    fea2 = out[:, 1 * Coutp:1 * Coutp + Cout]
    res1 = out[:, 2 * Coutp:2 * Coutp + Cout]
    res2 = out[:, 3 * Coutp:3 * Coutp + Cout]
    return fea1, fea2, res1, res2


def _reference(x_nchw, y_nchw, w1, b1, wt, bt):
    """Pure-JAX f32 reference mirroring the PyTorch semantics."""
    B, Cin, _, _ = x_nchw.shape
    Cout = w1.shape[1]

    def embed(inp):
        flat = jnp.transpose(inp.reshape(B, Cin, HW), (0, 2, 1))        # (B,49,Cin)
        e = flat @ w1 + b1                                              # (B,49,Cout)
        t = flat @ wt + bt
        e_nchw = jnp.transpose(e, (0, 2, 1)).reshape(B, Cout, H, W)
        t_nchw = jnp.transpose(t, (0, 2, 1)).reshape(B, Cout, H, W)
        fea = e_nchw.mean(axis=(2, 3))
        return e_nchw, fea, t_nchw

    x1, fea1, t1 = embed(x_nchw)
    y1, fea2, t2 = embed(y_nchw)
    wxy = jnp.abs(t1 - t2).reshape(B, Cout, -1)
    res1 = (x1.reshape(B, Cout, -1) * wxy).mean(axis=-1)
    res2 = (y1.reshape(B, Cout, -1) * wxy).mean(axis=-1)
    return fea1, fea2, res1, res2


if __name__ == "__main__":
    B, Cin, Cout = 2, 4, 16
    key = jax.random.PRNGKey(0)
    kx, ky, kw1, kb1, kwt, kbt = jax.random.split(key, 6)

    x = jax.random.normal(kx, (B, Cin, H, W), dtype=jnp.float32)
    y = jax.random.normal(ky, (B, Cin, H, W), dtype=jnp.float32)
    # deterministic synthetic embeddingnet parameters (1x1 conv weights/biases)
    w1 = jax.random.normal(kw1, (Cin, Cout), dtype=jnp.float32) * 0.1
    b1 = jax.random.normal(kb1, (Cout,), dtype=jnp.float32) * 0.1
    wt = jax.random.normal(kwt, (Cin, Cout), dtype=jnp.float32) * 0.1
    bt = jax.random.normal(kbt, (Cout,), dtype=jnp.float32) * 0.1

    outs = doublenet_forward(x, y, w1, b1, wt, bt)
    outs = jax.block_until_ready(outs)

    refs = _reference(x, y, w1, b1, wt, bt)
    # bf16 inputs/weights with f32 accumulation -> loosened tolerance.
    for o, r in zip(outs, refs):
        assert o.shape == r.shape
        assert jnp.allclose(o, r, atol=1e-2, rtol=1e-2)

    print("KERNEL_OK")
</pallas_src>

<mosaic_0001>
module attributes {stable_mosaic.version = 11 : i64} {
  func.func @doublenet_kernel(%arg0: i32, %arg1: memref<2x64x4xbf16, #tpu.memory_space<vmem>>, %arg2: memref<2x64x4xbf16, #tpu.memory_space<vmem>>, %arg3: memref<4x256xbf16, #tpu.memory_space<vmem>>, %arg4: memref<1x128xf32, #tpu.memory_space<vmem>>, %arg5: memref<2x512xf32, #tpu.memory_space<vmem>>) attributes {dimension_semantics = [#tpu.dimension_semantics<parallel>], iteration_bounds = array<i64: 1>, scalar_prefetch = 0 : i64, scratch_operands = 0 : i64, tpu.core_type = #tpu.core_type<tc>, window_params = [{transform_indices = @transform_0, window_bounds = array<i64: 2, 64, 4>}, {transform_indices = @transform_1, window_bounds = array<i64: 2, 64, 4>}, {pipeline_mode = #tpu.pipeline_mode<synchronous>, transform_indices = @transform_2, window_bounds = array<i64: 4, 256>}, {pipeline_mode = #tpu.pipeline_mode<synchronous>, transform_indices = @transform_3, window_bounds = array<i64: 1, 128>}, {transform_indices = @transform_4, window_bounds = array<i64: 2, 512>}]} {
    %c0 = arith.constant 0 : index
    %c0_0 = arith.constant 0 : index
    %0 = vector.load %arg3[%c0, %c0_0] : memref<4x256xbf16, #tpu.memory_space<vmem>>, vector<4x256xbf16>
    %c0_1 = arith.constant 0 : index
    %c0_2 = arith.constant 0 : index
    %c0_3 = arith.constant 0 : index
    %1 = vector.load %arg1[%c0_1, %c0_2, %c0_3] : memref<2x64x4xbf16, #tpu.memory_space<vmem>>, vector<2x64x4xbf16>
    %2 = vector.shape_cast %1 : vector<2x64x4xbf16> to vector<128x4xbf16>
    %cst = arith.constant dense<0.000000e+00> : vector<128x256xf32>
    %3 = tpu.matmul %2, %0, %cst {dimension_numbers = #tpu.dot_dimension_numbers<[1], [0], [0], [1], [0, 0, 1, 1], [], []>} : vector<128x4xbf16>, vector<4x256xbf16>, vector<128x256xf32> -> vector<128x256xf32>
    %c0_4 = arith.constant 0 : index
    %c0_5 = arith.constant 0 : index
    %c0_6 = arith.constant 0 : index
    %4 = vector.load %arg2[%c0_4, %c0_5, %c0_6] : memref<2x64x4xbf16, #tpu.memory_space<vmem>>, vector<2x64x4xbf16>
    %5 = vector.shape_cast %4 : vector<2x64x4xbf16> to vector<128x4xbf16>
    %cst_7 = arith.constant dense<0.000000e+00> : vector<128x256xf32>
    %6 = tpu.matmul %5, %0, %cst_7 {dimension_numbers = #tpu.dot_dimension_numbers<[1], [0], [0], [1], [0, 0, 1, 1], [], []>} : vector<128x4xbf16>, vector<4x256xbf16>, vector<128x256xf32> -> vector<128x256xf32>
    %7 = vector.extract_strided_slice %3 {offsets = [0, 0], sizes = [128, 128], strides = [1, 1]} : vector<128x256xf32> to vector<128x128xf32>
    %8 = vector.shape_cast %7 : vector<128x128xf32> to vector<2x64x128xf32>
    %9 = vector.extract_strided_slice %3 {offsets = [0, 128], sizes = [128, 128], strides = [1, 1]} : vector<128x256xf32> to vector<128x128xf32>
    %10 = vector.shape_cast %9 : vector<128x128xf32> to vector<2x64x128xf32>
    %11 = vector.extract_strided_slice %6 {offsets = [0, 0], sizes = [128, 128], strides = [1, 1]} : vector<128x256xf32> to vector<128x128xf32>
    %12 = vector.shape_cast %11 : vector<128x128xf32> to vector<2x64x128xf32>
    %13 = vector.extract_strided_slice %6 {offsets = [0, 128], sizes = [128, 128], strides = [1, 1]} : vector<128x256xf32> to vector<128x128xf32>
    %14 = vector.shape_cast %13 : vector<128x128xf32> to vector<2x64x128xf32>
    %c0_8 = arith.constant 0 : index
    %c0_9 = arith.constant 0 : index
    %15 = vector.load %arg4[%c0_8, %c0_9] : memref<1x128xf32, #tpu.memory_space<vmem>>, vector<1x128xf32>
    %16 = arith.subf %10, %14 : vector<2x64x128xf32>
    %17 = math.absf %16 : vector<2x64x128xf32>
    %cst_10 = arith.constant dense<0.000000e+00> : vector<2x128xf32>
    %18 = vector.multi_reduction <add>, %17, %cst_10 [1] : vector<2x64x128xf32> to vector<2x128xf32>
    %cst_11 = arith.constant 0.0204081628 : f32
    %19 = vector.broadcast %cst_11 : f32 to vector<2x128xf32>
    %20 = arith.mulf %18, %19 : vector<2x128xf32>
    %21 = vector.broadcast %15 : vector<1x128xf32> to vector<2x128xf32>
    %22 = arith.mulf %21, %20 : vector<2x128xf32>
    %cst_12 = arith.constant dense<0.000000e+00> : vector<2x128xf32>
    %23 = vector.multi_reduction <add>, %8, %cst_12 [1] : vector<2x64x128xf32> to vector<2x128xf32>
    %cst_13 = arith.constant 0.0204081628 : f32
    %24 = vector.broadcast %cst_13 : f32 to vector<2x128xf32>
    %25 = arith.mulf %23, %24 : vector<2x128xf32>
    %26 = vector.broadcast %15 : vector<1x128xf32> to vector<2x128xf32>
    %27 = arith.addf %25, %26 : vector<2x128xf32>
    %cst_14 = arith.constant dense<0.000000e+00> : vector<2x128xf32>
    %28 = vector.multi_reduction <add>, %12, %cst_14 [1] : vector<2x64x128xf32> to vector<2x128xf32>
    %cst_15 = arith.constant 0.0204081628 : f32
    %29 = vector.broadcast %cst_15 : f32 to vector<2x128xf32>
    %30 = arith.mulf %28, %29 : vector<2x128xf32>
    %31 = vector.broadcast %15 : vector<1x128xf32> to vector<2x128xf32>
    %32 = arith.addf %30, %31 : vector<2x128xf32>
    %33 = arith.mulf %8, %17 : vector<2x64x128xf32>
    %cst_16 = arith.constant dense<0.000000e+00> : vector<2x128xf32>
    %34 = vector.multi_reduction <add>, %33, %cst_16 [1] : vector<2x64x128xf32> to vector<2x128xf32>
    %cst_17 = arith.constant 0.0204081628 : f32
    %35 = vector.broadcast %cst_17 : f32 to vector<2x128xf32>
    %36 = arith.mulf %34, %35 : vector<2x128xf32>
    %37 = arith.addf %36, %22 : vector<2x128xf32>
    %38 = arith.mulf %12, %17 : vector<2x64x128xf32>
    %cst_18 = arith.constant dense<0.000000e+00> : vector<2x128xf32>
    %39 = vector.multi_reduction <add>, %38, %cst_18 [1] : vector<2x64x128xf32> to vector<2x128xf32>
    %cst_19 = arith.constant 0.0204081628 : f32
    %40 = vector.broadcast %cst_19 : f32 to vector<2x128xf32>
    %41 = arith.mulf %39, %40 : vector<2x128xf32>
    %42 = arith.addf %41, %22 : vector<2x128xf32>
    %43 = tpu.concatenate %27, %32, %37, %42 in 1 : vector<2x128xf32>, vector<2x128xf32>, vector<2x128xf32>, vector<2x128xf32> -> vector<2x512xf32>
    %c0_20 = arith.constant 0 : index
    %c0_21 = arith.constant 0 : index
    %44 = vector.load %arg5[%c0_20, %c0_21] : memref<2x512xf32, #tpu.memory_space<vmem>>, vector<2x512xf32>
    tpu.vector_store %arg5[%c0_20, %c0_21], %43 {strides = array<i32>} : memref<2x512xf32, #tpu.memory_space<vmem>>, vector<2x512xf32>,
    return
  }
  func.func @transform_0(%arg0: i32) -> (i32, i32, i32) {
    %c0_i32 = arith.constant 0 : i32
    %c0_i32_0 = arith.constant 0 : i32
    %c0_i32_1 = arith.constant 0 : i32
    return %arg0, %c0_i32, %c0_i32_0 : i32, i32, i32
  }
  func.func @transform_1(%arg0: i32) -> (i32, i32, i32) {
    %c0_i32 = arith.constant 0 : i32
    %c0_i32_0 = arith.constant 0 : i32
    %c0_i32_1 = arith.constant 0 : i32
    return %arg0, %c0_i32, %c0_i32_0 : i32, i32, i32
  }
  func.func @transform_2(%arg0: i32) -> (i32, i32) {
    %c0_i32 = arith.constant 0 : i32
    %c0_i32_0 = arith.constant 0 : i32
    %c0_i32_1 = arith.constant 0 : i32
    return %c0_i32, %c0_i32_0 : i32, i32
  }
  func.func @transform_3(%arg0: i32) -> (i32, i32) {
    %c0_i32 = arith.constant 0 : i32
    %c0_i32_0 = arith.constant 0 : i32
    %c0_i32_1 = arith.constant 0 : i32
    return %c0_i32, %c0_i32_0 : i32, i32
  }
  func.func @transform_4(%arg0: i32) -> (i32, i32) {
    %c0_i32 = arith.constant 0 : i32
    %c0_i32_0 = arith.constant 0 : i32
    return %arg0, %c0_i32 : i32, i32
  }
}

module attributes {stable_mosaic.version = 11 : i64} {
  func.func @doublenet_kernel(%arg0: i32, %arg1: memref<2x64x4xbf16, #tpu.memory_space<vmem>>, %arg2: memref<2x64x4xbf16, #tpu.memory_space<vmem>>, %arg3: memref<4x256xbf16, #tpu.memory_space<vmem>>, %arg4: memref<1x128xf32, #tpu.memory_space<vmem>>, %arg5: memref<2x512xf32, #tpu.memory_space<vmem>>) attributes {dimension_semantics = [#tpu.dimension_semantics<parallel>], iteration_bounds = array<i64: 1>, scalar_prefetch = 0 : i64, scratch_operands = 0 : i64, tpu.core_type = #tpu.core_type<tc>, window_params = [{transform_indices = @transform_0, window_bounds = array<i64: 2, 64, 4>}, {transform_indices = @transform_1, window_bounds = array<i64: 2, 64, 4>}, {pipeline_mode = #tpu.pipeline_mode<synchronous>, transform_indices = @transform_2, window_bounds = array<i64: 4, 256>}, {pipeline_mode = #tpu.pipeline_mode<synchronous>, transform_indices = @transform_3, window_bounds = array<i64: 1, 128>}, {transform_indices = @transform_4, window_bounds = array<i64: 2, 512>}]} {
    %c0 = arith.constant 0 : index
    %c0_0 = arith.constant 0 : index
    %0 = vector.load %arg3[%c0, %c0_0] : memref<4x256xbf16, #tpu.memory_space<vmem>>, vector<4x256xbf16>
    %c0_1 = arith.constant 0 : index
    %c0_2 = arith.constant 0 : index
    %c0_3 = arith.constant 0 : index
    %1 = vector.load %arg1[%c0_1, %c0_2, %c0_3] : memref<2x64x4xbf16, #tpu.memory_space<vmem>>, vector<2x64x4xbf16>
    %2 = vector.shape_cast %1 : vector<2x64x4xbf16> to vector<128x4xbf16>
    %cst = arith.constant dense<0.000000e+00> : vector<128x256xf32>
    %3 = tpu.matmul %2, %0, %cst {dimension_numbers = #tpu.dot_dimension_numbers<[1], [0], [0], [1], [0, 0, 1, 1], [], []>} : vector<128x4xbf16>, vector<4x256xbf16>, vector<128x256xf32> -> vector<128x256xf32>
    %c0_4 = arith.constant 0 : index
    %c0_5 = arith.constant 0 : index
    %c0_6 = arith.constant 0 : index
    %4 = vector.load %arg2[%c0_4, %c0_5, %c0_6] : memref<2x64x4xbf16, #tpu.memory_space<vmem>>, vector<2x64x4xbf16>
    %5 = vector.shape_cast %4 : vector<2x64x4xbf16> to vector<128x4xbf16>
    %cst_7 = arith.constant dense<0.000000e+00> : vector<128x256xf32>
    %6 = tpu.matmul %5, %0, %cst_7 {dimension_numbers = #tpu.dot_dimension_numbers<[1], [0], [0], [1], [0, 0, 1, 1], [], []>} : vector<128x4xbf16>, vector<4x256xbf16>, vector<128x256xf32> -> vector<128x256xf32>
    %7 = vector.extract_strided_slice %3 {offsets = [0, 0], sizes = [128, 128], strides = [1, 1]} : vector<128x256xf32> to vector<128x128xf32>
    %8 = vector.shape_cast %7 : vector<128x128xf32> to vector<2x64x128xf32>
    %9 = vector.extract_strided_slice %3 {offsets = [0, 128], sizes = [128, 128], strides = [1, 1]} : vector<128x256xf32> to vector<128x128xf32>
    %10 = vector.shape_cast %9 : vector<128x128xf32> to vector<2x64x128xf32>
    %11 = vector.extract_strided_slice %6 {offsets = [0, 0], sizes = [128, 128], strides = [1, 1]} : vector<128x256xf32> to vector<128x128xf32>
    %12 = vector.shape_cast %11 : vector<128x128xf32> to vector<2x64x128xf32>
    %13 = vector.extract_strided_slice %6 {offsets = [0, 128], sizes = [128, 128], strides = [1, 1]} : vector<128x256xf32> to vector<128x128xf32>
    %14 = vector.shape_cast %13 : vector<128x128xf32> to vector<2x64x128xf32>
    %c0_8 = arith.constant 0 : index
    %c0_9 = arith.constant 0 : index
    %15 = vector.load %arg4[%c0_8, %c0_9] : memref<1x128xf32, #tpu.memory_space<vmem>>, vector<1x128xf32>
    %16 = arith.subf %10, %14 : vector<2x64x128xf32>
    %17 = math.absf %16 : vector<2x64x128xf32>
    %cst_10 = arith.constant dense<0.000000e+00> : vector<2x128xf32>
    %18 = vector.multi_reduction <add>, %17, %cst_10 [1] : vector<2x64x128xf32> to vector<2x128xf32>
    %cst_11 = arith.constant 0.0204081628 : f32
    %19 = vector.broadcast %cst_11 : f32 to vector<2x128xf32>
    %20 = arith.mulf %18, %19 : vector<2x128xf32>
    %21 = vector.broadcast %15 : vector<1x128xf32> to vector<2x128xf32>
    %22 = arith.mulf %21, %20 : vector<2x128xf32>
    %cst_12 = arith.constant dense<0.000000e+00> : vector<2x128xf32>
    %23 = vector.multi_reduction <add>, %8, %cst_12 [1] : vector<2x64x128xf32> to vector<2x128xf32>
    %cst_13 = arith.constant 0.0204081628 : f32
    %24 = vector.broadcast %cst_13 : f32 to vector<2x128xf32>
    %25 = arith.mulf %23, %24 : vector<2x128xf32>
    %26 = vector.broadcast %15 : vector<1x128xf32> to vector<2x128xf32>
    %27 = arith.addf %25, %26 : vector<2x128xf32>
    %cst_14 = arith.constant dense<0.000000e+00> : vector<2x128xf32>
    %28 = vector.multi_reduction <add>, %12, %cst_14 [1] : vector<2x64x128xf32> to vector<2x128xf32>
    %cst_15 = arith.constant 0.0204081628 : f32
    %29 = vector.broadcast %cst_15 : f32 to vector<2x128xf32>
    %30 = arith.mulf %28, %29 : vector<2x128xf32>
    %31 = vector.broadcast %15 : vector<1x128xf32> to vector<2x128xf32>
    %32 = arith.addf %30, %31 : vector<2x128xf32>
    %33 = arith.mulf %8, %17 : vector<2x64x128xf32>
    %cst_16 = arith.constant dense<0.000000e+00> : vector<2x128xf32>
    %34 = vector.multi_reduction <add>, %33, %cst_16 [1] : vector<2x64x128xf32> to vector<2x128xf32>
    %cst_17 = arith.constant 0.0204081628 : f32
    %35 = vector.broadcast %cst_17 : f32 to vector<2x128xf32>
    %36 = arith.mulf %34, %35 : vector<2x128xf32>
    %37 = arith.addf %36, %22 : vector<2x128xf32>
    %38 = arith.mulf %12, %17 : vector<2x64x128xf32>
    %cst_18 = arith.constant dense<0.000000e+00> : vector<2x128xf32>
    %39 = vector.multi_reduction <add>, %38, %cst_18 [1] : vector<2x64x128xf32> to vector<2x128xf32>
    %cst_19 = arith.constant 0.0204081628 : f32
    %40 = vector.broadcast %cst_19 : f32 to vector<2x128xf32>
    %41 = arith.mulf %39, %40 : vector<2x128xf32>
    %42 = arith.addf %41, %22 : vector<2x128xf32>
    %43 = tpu.concatenate %27, %32, %37, %42 in 1 : vector<2x128xf32>, vector<2x128xf32>, vector<2x128xf32>, vector<2x128xf32> -> vector<2x512xf32>
    %c0_20 = arith.constant 0 : index
    %c0_21 = arith.constant 0 : index
    %44 = vector.load %arg5[%c0_20, %c0_21] : memref<2x512xf32, #tpu.memory_space<vmem>>, vector<2x512xf32>
    tpu.vector_store %arg5[%c0_20, %c0_21], %43 {strides = array<i32>} : memref<2x512xf32, #tpu.memory_space<vmem>>, vector<2x512xf32>,
    return
  }
  func.func @transform_0(%arg0: i32) -> (i32, i32, i32) {
    %c0_i32 = arith.constant 0 : i32
    %c0_i32_0 = arith.constant 0 : i32
    %c0_i32_1 = arith.constant 0 : i32
    return %arg0, %c0_i32, %c0_i32_0 : i32, i32, i32
  }
  func.func @transform_1(%arg0: i32) -> (i32, i32, i32) {
    %c0_i32 = arith.constant 0 : i32
    %c0_i32_0 = arith.constant 0 : i32
    %c0_i32_1 = arith.constant 0 : i32
    return %arg0, %c0_i32, %c0_i32_0 : i32, i32, i32
  }
  func.func @transform_2(%arg0: i32) -> (i32, i32) {
    %c0_i32 = arith.constant 0 : i32
    %c0_i32_0 = arith.constant 0 : i32
    %c0_i32_1 = arith.constant 0 : i32
    return %c0_i32, %c0_i32_0 : i32, i32
  }
  func.func @transform_3(%arg0: i32) -> (i32, i32) {
    %c0_i32 = arith.constant 0 : i32
    %c0_i32_0 = arith.constant 0 : i32
    %c0_i32_1 = arith.constant 0 : i32
    return %c0_i32, %c0_i32_0 : i32, i32
  }
  func.func @transform_4(%arg0: i32) -> (i32, i32) {
    %c0_i32 = arith.constant 0 : i32
    %c0_i32_0 = arith.constant 0 : i32
    return %arg0, %c0_i32 : i32, i32
  }
}

</mosaic_0001>

<llo_original>
// kernel: tpu_custom_call.1
$region0: #{tpu_custom_call.1}
  #allocation0 [shape = 'u32[]', space=smem, size = 0x4, offset = 0x4, fixed_abs, tag = 'smem constant byte address 0x4 - core index']
  #allocation1 [shape = 'u32[144,128]{1,0:T(1,128)}', space=vmem, size = 0x12000, scoped, tag = 'internal scratch']
  %s0 = inlined_call_operand.vmem [shape: bf16[2,64,4], index: 0, kind: input, shape index: {}]
  %s1 = inlined_call_operand.vmem [shape: bf16[2,64,4], index: 1, kind: input, shape index: {}]
  %s2 = inlined_call_operand.vmem [shape: bf16[4,256], index: 2, kind: input, shape index: {}]
  %s3 = inlined_call_operand.vmem [shape: f32[1,128], index: 3, kind: input, shape index: {}]
  %s4 = inlined_call_operand.hbm [shape: f32[2,512], index: 4, kind: output, shape index: {}]
  %s5 = sld [smem:[#allocation0]]
  $region26: #{tpu_custom_call.1} parent=0
    _
  %s7 = ssub.s32 1, %s5
  %s8 = scalar_select 0, %s7, %s5
  $region1: #{tpu_custom_call.1} parent=0
    #allocation2 [shape = 'u8[4096]{0}', space=vmem, size = 0x1000, scoped, tag = 'output window, operand 0, single buffered']
    #allocation3 [shape = 's32[1]{0}', space=sflag, size = 0x4, scoped, tag = 'scoped memory for tpu_custom_call.1']
    %9 = vsyncpa [#allocation3], 0
    // Predicated region
    $region2: #{tpu_custom_call.1} parent=1 // pred_check
      _
    $region3: #{tpu_custom_call.1} parent=1 // pred_check_branch
      %11 = sbr.rel (0) target = $region5
    $region4: #{tpu_custom_call.1} parent=1 // pred_region
      _
    $region5: #{tpu_custom_call.1} parent=1 // pred_fallthru
      _
    // Predicated region
    $region6: #{tpu_custom_call.1} parent=1 // pred_check
      _
    $region7: #{tpu_custom_call.1} parent=1 // pred_check_branch
      %13 = sbr.rel (0) target = $region9
    $region8: #{tpu_custom_call.1} parent=1 // pred_region
      _
    $region9: #{tpu_custom_call.1} parent=1 // pred_fallthru
      _
    // Predicated region
    $region10: #{tpu_custom_call.1} parent=1 // pred_check
      _
    $region11: #{tpu_custom_call.1} parent=1 // pred_check_branch
      %15 = sbr.rel (0) target = $region13
    $region12: #{tpu_custom_call.1} parent=1 // pred_region
      _
    $region13: #{tpu_custom_call.1} parent=1 // pred_fallthru
      _
    // Predicated region
    $region14: #{tpu_custom_call.1} parent=1 // pred_check
      _
    $region15: #{tpu_custom_call.1} parent=1 // pred_check_branch
      %17 = sbr.rel (0) target = $region17
    $region16: #{tpu_custom_call.1} parent=1 // pred_region
      _
    $region17: #{tpu_custom_call.1} parent=1 // pred_fallthru
      _
    %v19 = vld [vmem:[%s2] sm:$0xf]
    %v20 = vld [vmem:[%s0] sm:$0xf]
    %v21 = vld [vmem:[%s0 + $0x4] sm:$0xf]
    %v22 = vld [vmem:[%s0 + $0x8] sm:$0xf]
    %v23 = vld [vmem:[%s0 + $0xc] sm:$0xf]
    %v24 = vld [vmem:[%s0 + $0x10] sm:$0xf]
    %v25 = vld [vmem:[%s0 + $0x14] sm:$0xf]
    %v26 = vld [vmem:[%s0 + $0x18] sm:$0xf]
    %v27 = vld [vmem:[%s0 + $0x1c] sm:$0xf]
    %v28 = vld [vmem:[%s0 + $0x20] sm:$0xf]
    %v29 = vld [vmem:[%s0 + $0x24] sm:$0xf]
    %v30 = vld [vmem:[%s0 + $0x28] sm:$0xf]
    %v31 = vld [vmem:[%s0 + $0x2c] sm:$0xf]
    %v32 = vld [vmem:[%s0 + $0x30] sm:$0xf]
    %v33 = vld [vmem:[%s0 + $0x34] sm:$0xf]
    %v34 = vld [vmem:[%s0 + $0x38] sm:$0xf]
    %v35 = vld [vmem:[%s0 + $0x3c] sm:$0xf]
    %v52 = vunpack.c.l.b16 %v20
    %v53 = vunpack.c.l.b16 %v21
    %v54 = vunpack.c.l.b16 %v22
    %v55 = vunpack.c.l.b16 %v23
    %v56 = vunpack.c.l.b16 %v24
    %v57 = vunpack.c.l.b16 %v25
    %v58 = vunpack.c.l.b16 %v26
    %v59 = vunpack.c.l.b16 %v27
    %v60 = vunpack.c.l.b16 %v28
    %v61 = vunpack.c.l.b16 %v29
    %v62 = vunpack.c.l.b16 %v30
    %v63 = vunpack.c.l.b16 %v31
    %v64 = vunpack.c.l.b16 %v32
    %v65 = vunpack.c.l.b16 %v33
    %v66 = vunpack.c.l.b16 %v34
    %v67 = vunpack.c.l.b16 %v35
    %v68 = vpack.c.b16 %v53, %v52
    %v69 = vpack.c.b16 %v55, %v54
    %v70 = vpack.c.b16 %v57, %v56
    %v71 = vpack.c.b16 %v59, %v58
    %v72 = vpack.c.b16 %v61, %v60
    %v73 = vpack.c.b16 %v63, %v62
    %v74 = vpack.c.b16 %v65, %v64
    %v75 = vpack.c.b16 %v67, %v66
    %v78 = vunpack.c.l.s4 1983009808
    %v79 = vunpack.c.0.s8 %v78
    %v80 = vlaneseq
    %v81 = vshrl.u32 %v80, 7
    %v82 = vsub.s32 %v79, %v81
    %v83 = vrot.slane %v19, %v82
    %v84 = vcombine.high %v83, %v83
    %vm85 = vcmask 31744
    %v87 = vsel %vm85, %v68, 0
    %v90 = vsel %vm85, %v69, 0
    %v93 = vsel %vm85, %v70, 0
    %v96 = vsel %vm85, %v71, 0
    %v99 = vsel %vm85, %v72, 0
    %v102 = vsel %vm85, %v73, 0
    %v105 = vsel %vm85, %v74, 0
    %v108 = vsel %vm85, %v75, 0
    %vm110 = vcmask 1041408
    %v112 = vsel %vm110, %v83, 0
    %v115 = vsel %vm110, %v84, 0
    %117 = vmatprep.subr.bf16.mxu0 %v115
    %118 = vmatpush1.bf16.msra.mxu0 %v112
    %119 = vmatprep.subr.bf16.mxu0 0
    %120 = vmatpush1.bf16.msra.mxu0 0
    %121 = vmatprep.subr.bf16.mxu0 0
    %122 = vmatpush1.bf16.msra.mxu0 0
    %123 = vmatprep.subr.bf16.mxu0 0
    %124 = vmatpush1.bf16.msra.mxu0 0
    %125 = vmatprep.subr.bf16.mxu0 0
    %126 = vmatpush1.bf16.msra.mxu0 0
    %127 = vmatprep.subr.bf16.mxu0 0
    %128 = vmatpush1.bf16.msra.mxu0 0
    %129 = vmatprep.subr.bf16.mxu0 0
    %130 = vmatpush1.bf16.msra.mxu0 0
    %131 = vmatprep.subr.bf16.mxu0 0
    %132 = vmatpush1.bf16.msra.mxu0 0
    %133 = vmatprep.subr.bf16.mxu0 0
    %134 = vmatpush1.bf16.msra.mxu0 0
    %135 = vmatprep.subr.bf16.mxu0 0
    %136 = vmatpush1.bf16.msra.mxu0 0
    %137 = vmatprep.subr.bf16.mxu0 0
    %138 = vmatpush1.bf16.msra.mxu0 0
    %139 = vmatprep.subr.bf16.mxu0 0
    %140 = vmatpush1.bf16.msra.mxu0 0
    %141 = vmatprep.subr.bf16.mxu0 0
    %142 = vmatpush1.bf16.msra.mxu0 0
    %143 = vmatprep.subr.bf16.mxu0 0
    %144 = vmatpush1.bf16.msra.mxu0 0
    %145 = vmatprep.subr.bf16.mxu0 0
    %146 = vmatpush1.bf16.msra.mxu0 0
    %147 = vmatprep.subr.bf16.mxu0 0
    %148 = vmatpush1.bf16.msra.mxu0 0
    %149 = vmatprep.mubr.bf16.mxu0 0
    %150 = vmatmul.mubr.bf16.gmra.mrb[0].mxu0 %v87
    %v151 = vpop.f32.mrb[0].mxu0
    %v152 = vadd.f32 0.0, %v151
    %v153 = vpop.f32.mrb[0].mxu0
    %v154 = vadd.f32 0.0, %v153
    %v155 = vpop.f32.mrb[0].mxu0
    %v156 = vadd.f32 0.0, %v155
    %v157 = vpop.f32.mrb[0].mxu0
    %v158 = vadd.f32 0.0, %v157
    %159 = vmatprep.mubr.bf16.mxu0 0
    %160 = vmatmul.mubr.bf16.gmra.mrb[0].mxu0 %v90
    %v161 = vpop.f32.mrb[0].mxu0
    %v162 = vadd.f32 0.0, %v161
    %v163 = vpop.f32.mrb[0].mxu0
    %v164 = vadd.f32 0.0, %v163
    %v165 = vpop.f32.mrb[0].mxu0
    %v166 = vadd.f32 0.0, %v165
    %v167 = vpop.f32.mrb[0].mxu0
    %v168 = vadd.f32 0.0, %v167
    %169 = vmatprep.mubr.bf16.mxu0 0
    %170 = vmatmul.mubr.bf16.gmra.mrb[0].mxu0 %v93
    %v171 = vpop.f32.mrb[0].mxu0
    %v172 = vadd.f32 0.0, %v171
    %v173 = vpop.f32.mrb[0].mxu0
    %v174 = vadd.f32 0.0, %v173
    %v175 = vpop.f32.mrb[0].mxu0
    %v176 = vadd.f32 0.0, %v175
    %v177 = vpop.f32.mrb[0].mxu0
    %v178 = vadd.f32 0.0, %v177
    %179 = vmatprep.mubr.bf16.mxu0 0
    %180 = vmatmul.mubr.bf16.gmra.mrb[0].mxu0 %v96
    %v181 = vpop.f32.mrb[0].mxu0
    %v182 = vadd.f32 0.0, %v181
    %v183 = vpop.f32.mrb[0].mxu0
    %v184 = vadd.f32 0.0, %v183
    %v185 = vpop.f32.mrb[0].mxu0
    %v186 = vadd.f32 0.0, %v185
    %v187 = vpop.f32.mrb[0].mxu0
    %v188 = vadd.f32 0.0, %v187
    %189 = vmatprep.mubr.bf16.mxu0 0
    %190 = vmatmul.mubr.bf16.gmra.mrb[0].mxu0 %v99
    %v191 = vpop.f32.mrb[0].mxu0
    %v192 = vadd.f32 0.0, %v191
    %v193 = vpop.f32.mrb[0].mxu0
    %v194 = vadd.f32 0.0, %v193
    %v195 = vpop.f32.mrb[0].mxu0
    %v196 = vadd.f32 0.0, %v195
    %v197 = vpop.f32.mrb[0].mxu0
    %v198 = vadd.f32 0.0, %v197
    %199 = vmatprep.mubr.bf16.mxu0 0
    %200 = vmatmul.mubr.bf16.gmra.mrb[0].mxu0 %v102
    %v201 = vpop.f32.mrb[0].mxu0
    %v202 = vadd.f32 0.0, %v201
    %v203 = vpop.f32.mrb[0].mxu0
    %v204 = vadd.f32 0.0, %v203
    %v205 = vpop.f32.mrb[0].mxu0
    %v206 = vadd.f32 0.0, %v205
    %v207 = vpop.f32.mrb[0].mxu0
    %v208 = vadd.f32 0.0, %v207
    %209 = vmatprep.mubr.bf16.mxu0 0
    %210 = vmatmul.mubr.bf16.gmra.mrb[0].mxu0 %v105
    %v211 = vpop.f32.mrb[0].mxu0
    %v212 = vadd.f32 0.0, %v211
    %v213 = vpop.f32.mrb[0].mxu0
    %v214 = vadd.f32 0.0, %v213
    %v215 = vpop.f32.mrb[0].mxu0
    %v216 = vadd.f32 0.0, %v215
    %v217 = vpop.f32.mrb[0].mxu0
    %v218 = vadd.f32 0.0, %v217
    %219 = vmatprep.mubr.bf16.mxu0 0
    %220 = vmatmul.mubr.bf16.gmra.mrb[0].mxu0 %v108
    %v221 = vpop.f32.mrb[0].mxu0
    %v222 = vadd.f32 0.0, %v221
    %v223 = vpop.f32.mrb[0].mxu0
    %v224 = vadd.f32 0.0, %v223
    %v225 = vpop.f32.mrb[0].mxu0
    %v226 = vadd.f32 0.0, %v225
    %v227 = vpop.f32.mrb[0].mxu0
    %v228 = vadd.f32 0.0, %v227
    %229 = vdwg.mxu0
    %v230 = vld [vmem:[%s1] sm:$0xf]
    %v231 = vld [vmem:[%s1 + $0x4] sm:$0xf]
    %v232 = vld [vmem:[%s1 + $0x8] sm:$0xf]
    %v233 = vld [vmem:[%s1 + $0xc] sm:$0xf]
    %v234 = vld [vmem:[%s1 + $0x10] sm:$0xf]
    %v235 = vld [vmem:[%s1 + $0x14] sm:$0xf]
    %v236 = vld [vmem:[%s1 + $0x18] sm:$0xf]
    %v237 = vld [vmem:[%s1 + $0x1c] sm:$0xf]
    %v238 = vld [vmem:[%s1 + $0x20] sm:$0xf]
    %v239 = vld [vmem:[%s1 + $0x24] sm:$0xf]
    %v240 = vld [vmem:[%s1 + $0x28] sm:$0xf]
    %v241 = vld [vmem:[%s1 + $0x2c] sm:$0xf]
    %v242 = vld [vmem:[%s1 + $0x30] sm:$0xf]
    %v243 = vld [vmem:[%s1 + $0x34] sm:$0xf]
    %v244 = vld [vmem:[%s1 + $0x38] sm:$0xf]
    %v245 = vld [vmem:[%s1 + $0x3c] sm:$0xf]
    %v262 = vunpack.c.l.b16 %v230
    %v263 = vunpack.c.l.b16 %v231
    %v264 = vunpack.c.l.b16 %v232
    %v265 = vunpack.c.l.b16 %v233
    %v266 = vunpack.c.l.b16 %v234
    %v267 = vunpack.c.l.b16 %v235
    %v268 = vunpack.c.l.b16 %v236
    %v269 = vunpack.c.l.b16 %v237
    %v270 = vunpack.c.l.b16 %v238
    %v271 = vunpack.c.l.b16 %v239
    %v272 = vunpack.c.l.b16 %v240
    %v273 = vunpack.c.l.b16 %v241
    %v274 = vunpack.c.l.b16 %v242
    %v275 = vunpack.c.l.b16 %v243
    %v276 = vunpack.c.l.b16 %v244
    %v277 = vunpack.c.l.b16 %v245
    %v278 = vpack.c.b16 %v263, %v262
    %v279 = vpack.c.b16 %v265, %v264
    %v280 = vpack.c.b16 %v267, %v266
    %v281 = vpack.c.b16 %v269, %v268
    %v282 = vpack.c.b16 %v271, %v270
    %v283 = vpack.c.b16 %v273, %v272
    %v284 = vpack.c.b16 %v275, %v274
    %v285 = vpack.c.b16 %v277, %v276
    %v287 = vsel %vm85, %v278, 0
    %v290 = vsel %vm85, %v279, 0
    %v293 = vsel %vm85, %v280, 0
    %v296 = vsel %vm85, %v281, 0
    %v299 = vsel %vm85, %v282, 0
    %v302 = vsel %vm85, %v283, 0
    %v305 = vsel %vm85, %v284, 0
    %v308 = vsel %vm85, %v285, 0
    %310 = vmatprep.subr.bf16.mxu0 %v115
    %311 = vmatpush1.bf16.msra.mxu0 %v112
    %312 = vmatprep.subr.bf16.mxu0 0
    %313 = vmatpush1.bf16.msra.mxu0 0
    %314 = vmatprep.subr.bf16.mxu0 0
    %315 = vmatpush1.bf16.msra.mxu0 0
    %316 = vmatprep.subr.bf16.mxu0 0
    %317 = vmatpush1.bf16.msra.mxu0 0
    %318 = vmatprep.subr.bf16.mxu0 0
    %319 = vmatpush1.bf16.msra.mxu0 0
    %320 = vmatprep.subr.bf16.mxu0 0
    %321 = vmatpush1.bf16.msra.mxu0 0
    %322 = vmatprep.subr.bf16.mxu0 0
    %323 = vmatpush1.bf16.msra.mxu0 0
    %324 = vmatprep.subr.bf16.mxu0 0
    %325 = vmatpush1.bf16.msra.mxu0 0
    %326 = vmatprep.subr.bf16.mxu0 0
    %327 = vmatpush1.bf16.msra.mxu0 0
    %328 = vmatprep.subr.bf16.mxu0 0
    %329 = vmatpush1.bf16.msra.mxu0 0
    %330 = vmatprep.subr.bf16.mxu0 0
    %331 = vmatpush1.bf16.msra.mxu0 0
    %332 = vmatprep.subr.bf16.mxu0 0
    %333 = vmatpush1.bf16.msra.mxu0 0
    %334 = vmatprep.subr.bf16.mxu0 0
    %335 = vmatpush1.bf16.msra.mxu0 0
    %336 = vmatprep.subr.bf16.mxu0 0
    %337 = vmatpush1.bf16.msra.mxu0 0
    %338 = vmatprep.subr.bf16.mxu0 0
    %339 = vmatpush1.bf16.msra.mxu0 0
    %340 = vmatprep.subr.bf16.mxu0 0
    %341 = vmatpush1.bf16.msra.mxu0 0
    %342 = vmatprep.mubr.bf16.mxu0 0
    %343 = vmatmul.mubr.bf16.gmra.mrb[0].mxu0 %v287
    %v344 = vpop.f32.mrb[0].mxu0
    %v345 = vadd.f32 0.0, %v344
    %v346 = vpop.f32.mrb[0].mxu0
    %v347 = vadd.f32 0.0, %v346
    %v348 = vpop.f32.mrb[0].mxu0
    %v349 = vadd.f32 0.0, %v348
    %v350 = vpop.f32.mrb[0].mxu0
    %v351 = vadd.f32 0.0, %v350
    %352 = vmatprep.mubr.bf16.mxu0 0
    %353 = vmatmul.mubr.bf16.gmra.mrb[0].mxu0 %v290
    %v354 = vpop.f32.mrb[0].mxu0
    %v355 = vadd.f32 0.0, %v354
    %v356 = vpop.f32.mrb[0].mxu0
    %v357 = vadd.f32 0.0, %v356
    %v358 = vpop.f32.mrb[0].mxu0
    %v359 = vadd.f32 0.0, %v358
    %v360 = vpop.f32.mrb[0].mxu0
    %v361 = vadd.f32 0.0, %v360
    %362 = vmatprep.mubr.bf16.mxu0 0
    %363 = vmatmul.mubr.bf16.gmra.mrb[0].mxu0 %v293
    %v364 = vpop.f32.mrb[0].mxu0
    %v365 = vadd.f32 0.0, %v364
    %v366 = vpop.f32.mrb[0].mxu0
    %v367 = vadd.f32 0.0, %v366
    %v368 = vpop.f32.mrb[0].mxu0
    %v369 = vadd.f32 0.0, %v368
    %v370 = vpop.f32.mrb[0].mxu0
    %v371 = vadd.f32 0.0, %v370
    %372 = vmatprep.mubr.bf16.mxu0 0
    %373 = vmatmul.mubr.bf16.gmra.mrb[0].mxu0 %v296
    %v374 = vpop.f32.mrb[0].mxu0
    %v375 = vadd.f32 0.0, %v374
    %v376 = vpop.f32.mrb[0].mxu0
    %v377 = vadd.f32 0.0, %v376
    %v378 = vpop.f32.mrb[0].mxu0
    %v379 = vadd.f32 0.0, %v378
    %v380 = vpop.f32.mrb[0].mxu0
    %v381 = vadd.f32 0.0, %v380
    %382 = vmatprep.mubr.bf16.mxu0 0
    %383 = vmatmul.mubr.bf16.gmra.mrb[0].mxu0 %v299
    %v384 = vpop.f32.mrb[0].mxu0
    %v385 = vadd.f32 0.0, %v384
    %v386 = vpop.f32.mrb[0].mxu0
    %v387 = vadd.f32 0.0, %v386
    %v388 = vpop.f32.mrb[0].mxu0
    %v389 = vadd.f32 0.0, %v388
    %v390 = vpop.f32.mrb[0].mxu0
    %v391 = vadd.f32 0.0, %v390
    %392 = vmatprep.mubr.bf16.mxu0 0
    %393 = vmatmul.mubr.bf16.gmra.mrb[0].mxu0 %v302
    %v394 = vpop.f32.mrb[0].mxu0
    %v395 = vadd.f32 0.0, %v394
    %v396 = vpop.f32.mrb[0].mxu0
    %v397 = vadd.f32 0.0, %v396
    %v398 = vpop.f32.mrb[0].mxu0
    %v399 = vadd.f32 0.0, %v398
    %v400 = vpop.f32.mrb[0].mxu0
    %v401 = vadd.f32 0.0, %v400
    %402 = vmatprep.mubr.bf16.mxu0 0
    %403 = vmatmul.mubr.bf16.gmra.mrb[0].mxu0 %v305
    %v404 = vpop.f32.mrb[0].mxu0
    %v405 = vadd.f32 0.0, %v404
    %v406 = vpop.f32.mrb[0].mxu0
    %v407 = vadd.f32 0.0, %v406
    %v408 = vpop.f32.mrb[0].mxu0
    %v409 = vadd.f32 0.0, %v408
    %v410 = vpop.f32.mrb[0].mxu0
    %v411 = vadd.f32 0.0, %v410
    %412 = vmatprep.mubr.bf16.mxu0 0
    %413 = vmatmul.mubr.bf16.gmra.mrb[0].mxu0 %v308
    %v414 = vpop.f32.mrb[0].mxu0
    %v415 = vadd.f32 0.0, %v414
    %v416 = vpop.f32.mrb[0].mxu0
    %v417 = vadd.f32 0.0, %v416
    %v418 = vpop.f32.mrb[0].mxu0
    %v419 = vadd.f32 0.0, %v418
    %v420 = vpop.f32.mrb[0].mxu0
    %v421 = vadd.f32 0.0, %v420
    %422 = vdwg.mxu0
    %v423 = vld [vmem:[%s3] sm:$0x1]
    %v424 = vsub.f32 %v154, %v347
    %v425 = vsub.f32 %v158, %v351
    %v426 = vsub.f32 %v164, %v357
    %v427 = vsub.f32 %v168, %v361
    %v428 = vsub.f32 %v174, %v367
    %v429 = vsub.f32 %v178, %v371
    %v430 = vsub.f32 %v184, %v377
    %v431 = vsub.f32 %v188, %v381
    %v432 = vsub.f32 %v194, %v387
    %v433 = vsub.f32 %v198, %v391
    %v434 = vsub.f32 %v204, %v397
    %v435 = vsub.f32 %v208, %v401
    %v436 = vsub.f32 %v214, %v407
    %v437 = vsub.f32 %v218, %v411
    %v438 = vsub.f32 %v224, %v417
    %v439 = vsub.f32 %v228, %v421
    %v440 = vand.u32 2147483647, %v424
    %v441 = vand.u32 2147483647, %v425
    %v442 = vand.u32 2147483647, %v426
    %v443 = vand.u32 2147483647, %v427
    %v444 = vand.u32 2147483647, %v428
    %v445 = vand.u32 2147483647, %v429
    %v446 = vand.u32 2147483647, %v430
    %v447 = vand.u32 2147483647, %v431
    %v448 = vand.u32 2147483647, %v432
    %v449 = vand.u32 2147483647, %v433
    %v450 = vand.u32 2147483647, %v434
    %v451 = vand.u32 2147483647, %v435
    %v452 = vand.u32 2147483647, %v436
    %v453 = vand.u32 2147483647, %v437
    %v454 = vand.u32 2147483647, %v438
    %v455 = vand.u32 2147483647, %v439
    %v456 = vadd.f32 %v440, %v441
    %v457 = vadd.f32 %v456, %v442
    %v458 = vadd.f32 %v457, %v443
    %v459 = vadd.f32 %v458, %v444
    %v460 = vadd.f32 %v459, %v445
    %v461 = vadd.f32 %v460, %v446
    %v462 = vadd.f32 %v461, %v447
    %v463 = vrot.slane %v462, 4
    %v464 = vadd.f32 %v462, %v463
    %v465 = vrot.slane %v464, 2
    %v466 = vadd.f32 %v464, %v465
    %v467 = vrot.slane %v466, 1
    %v468 = vadd.f32 %v466, %v467
    %v469 = vadd.f32 %v448, %v449
    %v470 = vadd.f32 %v469, %v450
    %v471 = vadd.f32 %v470, %v451
    %v472 = vadd.f32 %v471, %v452
    %v473 = vadd.f32 %v472, %v453
    %v474 = vadd.f32 %v473, %v454
    %v475 = vadd.f32 %v474, %v455
    %v476 = vrot.slane %v475, 4
    %v477 = vadd.f32 %v475, %v476
    %v478 = vrot.slane %v477, 2
    %v479 = vadd.f32 %v477, %v478
    %v480 = vrot.slane %v479, 1
    %v481 = vadd.f32 %v479, %v480
    %v482 = vmul.f32 %v468, 0.020408163
    %v483 = vmul.f32 %v481, 0.020408163
    %v485 = vlaneseq
    %v486 = vshrl.u32 %v485, 7
    %v487 = vsub.s32 0, %v486
    %v488 = vrot.slane %v423, %v487
    %vm492 = vcmask 1041409
    %v493 = vsel %vm492, %v483, %v482
    %v495 = vmul.f32 %v488, %v493
    %v496 = vadd.f32 %v152, %v156
    %v497 = vadd.f32 %v496, %v162
    %v498 = vadd.f32 %v497, %v166
    %v499 = vadd.f32 %v498, %v172
    %v500 = vadd.f32 %v499, %v176
    %v501 = vadd.f32 %v500, %v182
    %v502 = vadd.f32 %v501, %v186
    %v503 = vrot.slane %v502, 4
    %v504 = vadd.f32 %v502, %v503
    %v505 = vrot.slane %v504, 2
    %v506 = vadd.f32 %v504, %v505
    %v507 = vrot.slane %v506, 1
    %v508 = vadd.f32 %v506, %v507
    %v509 = vadd.f32 %v192, %v196
    %v510 = vadd.f32 %v509, %v202
    %v511 = vadd.f32 %v510, %v206
    %v512 = vadd.f32 %v511, %v212
    %v513 = vadd.f32 %v512, %v216
    %v514 = vadd.f32 %v513, %v222
    %v515 = vadd.f32 %v514, %v226
    %v516 = vrot.slane %v515, 4
    %v517 = vadd.f32 %v515, %v516
    %v518 = vrot.slane %v517, 2
    %v519 = vadd.f32 %v517, %v518
    %v520 = vrot.slane %v519, 1
    %v521 = vadd.f32 %v519, %v520
    %v522 = vmul.f32 %v508, 0.020408163
    %v523 = vmul.f32 %v521, 0.020408163
    %v524 = vadd.f32 %v522, %v488
    %v525 = vadd.f32 %v523, %v488
    %v526 = vadd.f32 %v345, %v349
    %v527 = vadd.f32 %v526, %v355
    %v528 = vadd.f32 %v527, %v359
    %v529 = vadd.f32 %v528, %v365
    %v530 = vadd.f32 %v529, %v369
    %v531 = vadd.f32 %v530, %v375
    %v532 = vadd.f32 %v531, %v379
    %v533 = vrot.slane %v532, 4
    %v534 = vadd.f32 %v532, %v533
    %v535 = vrot.slane %v534, 2
    %v536 = vadd.f32 %v534, %v535
    %v537 = vrot.slane %v536, 1
    %v538 = vadd.f32 %v536, %v537
    %v539 = vadd.f32 %v385, %v389
    %v540 = vadd.f32 %v539, %v395
    %v541 = vadd.f32 %v540, %v399
    %v542 = vadd.f32 %v541, %v405
    %v543 = vadd.f32 %v542, %v409
    %v544 = vadd.f32 %v543, %v415
    %v545 = vadd.f32 %v544, %v419
    %v546 = vrot.slane %v545, 4
    %v547 = vadd.f32 %v545, %v546
    %v548 = vrot.slane %v547, 2
    %v549 = vadd.f32 %v547, %v548
    %v550 = vrot.slane %v549, 1
    %v551 = vadd.f32 %v549, %v550
    %v552 = vmul.f32 %v538, 0.020408163
    %v553 = vmul.f32 %v551, 0.020408163
    %v554 = vadd.f32 %v552, %v488
    %v555 = vadd.f32 %v553, %v488
    %v556 = vmul.f32 %v152, %v440
    %v557 = vmul.f32 %v156, %v441
    %v558 = vmul.f32 %v162, %v442
    %v559 = vmul.f32 %v166, %v443
    %v560 = vmul.f32 %v172, %v444
    %v561 = vmul.f32 %v176, %v445
    %v562 = vmul.f32 %v182, %v446
    %v563 = vmul.f32 %v186, %v447
    %v564 = vmul.f32 %v192, %v448
    %v565 = vmul.f32 %v196, %v449
    %v566 = vmul.f32 %v202, %v450
    %v567 = vmul.f32 %v206, %v451
    %v568 = vmul.f32 %v212, %v452
    %v569 = vmul.f32 %v216, %v453
    %v570 = vmul.f32 %v222, %v454
    %v571 = vmul.f32 %v226, %v455
    %v572 = vadd.f32 %v556, %v557
    %v573 = vadd.f32 %v572, %v558
    %v574 = vadd.f32 %v573, %v559
    %v575 = vadd.f32 %v574, %v560
    %v576 = vadd.f32 %v575, %v561
    %v577 = vadd.f32 %v576, %v562
    %v578 = vadd.f32 %v577, %v563
    %v579 = vrot.slane %v578, 4
    %v580 = vadd.f32 %v578, %v579
    %v581 = vrot.slane %v580, 2
    %v582 = vadd.f32 %v580, %v581
    %v583 = vrot.slane %v582, 1
    %v584 = vadd.f32 %v582, %v583
    %v585 = vadd.f32 %v564, %v565
    %v586 = vadd.f32 %v585, %v566
    %v587 = vadd.f32 %v586, %v567
    %v588 = vadd.f32 %v587, %v568
    %v589 = vadd.f32 %v588, %v569
    %v590 = vadd.f32 %v589, %v570
    %v591 = vadd.f32 %v590, %v571
    %v592 = vrot.slane %v591, 4
    %v593 = vadd.f32 %v591, %v592
    %v594 = vrot.slane %v593, 2
    %v595 = vadd.f32 %v593, %v594
    %v596 = vrot.slane %v595, 1
    %v597 = vadd.f32 %v595, %v596
    %v598 = vmul.f32 %v584, 0.020408163
    %v599 = vmul.f32 %v597, 0.020408163
    %v601 = vrot.slane %v495, 1
    %v604 = vadd.f32 %v598, %v495
    %v605 = vadd.f32 %v599, %v601
    %v606 = vmul.f32 %v345, %v440
    %v607 = vmul.f32 %v349, %v441
    %v608 = vmul.f32 %v355, %v442
    %v609 = vmul.f32 %v359, %v443
    %v610 = vmul.f32 %v365, %v444
    %v611 = vmul.f32 %v369, %v445
    %v612 = vmul.f32 %v375, %v446
    %v613 = vmul.f32 %v379, %v447
    %v614 = vmul.f32 %v385, %v448
    %v615 = vmul.f32 %v389, %v449
    %v616 = vmul.f32 %v395, %v450
    %v617 = vmul.f32 %v399, %v451
    %v618 = vmul.f32 %v405, %v452
    %v619 = vmul.f32 %v409, %v453
    %v620 = vmul.f32 %v415, %v454
    %v621 = vmul.f32 %v419, %v455
    %v622 = vadd.f32 %v606, %v607
    %v623 = vadd.f32 %v622, %v608
    %v624 = vadd.f32 %v623, %v609
    %v625 = vadd.f32 %v624, %v610
    %v626 = vadd.f32 %v625, %v611
    %v627 = vadd.f32 %v626, %v612
    %v628 = vadd.f32 %v627, %v613
    %v629 = vrot.slane %v628, 4
    %v630 = vadd.f32 %v628, %v629
    %v631 = vrot.slane %v630, 2
    %v632 = vadd.f32 %v630, %v631
    %v633 = vrot.slane %v632, 1
    %v634 = vadd.f32 %v632, %v633
    %v635 = vadd.f32 %v614, %v615
    %v636 = vadd.f32 %v635, %v616
    %v637 = vadd.f32 %v636, %v617
    %v638 = vadd.f32 %v637, %v618
    %v639 = vadd.f32 %v638, %v619
    %v640 = vadd.f32 %v639, %v620
    %v641 = vadd.f32 %v640, %v621
    %v642 = vrot.slane %v641, 4
    %v643 = vadd.f32 %v641, %v642
    %v644 = vrot.slane %v643, 2
    %v645 = vadd.f32 %v643, %v644
    %v646 = vrot.slane %v645, 1
    %v647 = vadd.f32 %v645, %v646
    %v648 = vmul.f32 %v634, 0.020408163
    %v649 = vmul.f32 %v647, 0.020408163
    %v650 = vadd.f32 %v648, %v495
    %v651 = vadd.f32 %v649, %v601
    %v654 = vrot.slane %v525, 7
    %v655 = vsel %vm492, %v654, %v524
    %v658 = vrot.slane %v555, 7
    %v659 = vsel %vm492, %v658, %v554
    %v662 = vrot.slane %v605, 7
    %v663 = vsel %vm492, %v662, %v604
    %v666 = vrot.slane %v651, 7
    %v667 = vsel %vm492, %v666, %v650
    %v668 = vcombine.low %v655, %v659
    %v669 = vcombine.low %v663, %v667
    %v671 = vunpack.c.l.s4 1983009808
    %v672 = vunpack.c.0.s8 %v671
    %v673 = vlaneseq
    %v674 = vshrl.u32 %v673, 7
    %v675 = vsub.s32 %v672, %v674
    %v676 = vrot.slane %v668, %v675
    %v678 = vunpack.c.l.s4 1983009808
    %v679 = vunpack.c.0.s8 %v678
    %v680 = vlaneseq
    %v681 = vshrl.u32 %v680, 7
    %v682 = vsub.s32 %v679, %v681
    %v683 = vrot.slane %v669, %v682
    %v684 = vcombine.low %v676, %v683
    %686 = vst [vmem:[#allocation2] sm:$0xff] %v684
    // Predicated region
    $region18: #{tpu_custom_call.1} parent=1 // pred_check
      _
    $region19: #{tpu_custom_call.1} parent=1 // pred_check_branch
      %688 = sbr.rel (0) target = $region21
    $region20: #{tpu_custom_call.1} parent=1 // pred_region
      %s690 = ssub.s32 128, 128
      %691 = vsyncadd [#allocation3], %s690
      %s693 = sshll.u32 [#allocation2], 4
      %s694 = int_to_ptr.vmem [resolvable:$true] %s693
      %696 = dma.vmem_to_hbm [thread:$0]  %s694, 128, %s4, [#allocation3]
    $region21: #{tpu_custom_call.1} parent=1 // pred_fallthru
      _
    // Predicated region
    $region22: #{tpu_custom_call.1} parent=1 // pred_check
      _
    $region23: #{tpu_custom_call.1} parent=1 // pred_check_branch
      %698 = sbr.rel (0) target = $region25
    $region24: #{tpu_custom_call.1} parent=1 // pred_region
      %699 = dma.done [#allocation3], 128
    $region25: #{tpu_custom_call.1} parent=1 // pred_fallthru
      _
    %700 = vsyncpa [#allocation3], 1

// kernel: tpu_custom_call.1
$region0: #{tpu_custom_call.1}
  #allocation0 [shape = 'u32[]', space=smem, size = 0x4, offset = 0x4, fixed_abs, tag = 'smem constant byte address 0x4 - core index']
  #allocation1 [shape = 'u32[144,128]{1,0:T(1,128)}', space=vmem, size = 0x12000, scoped, tag = 'internal scratch']
  %s0 = inlined_call_operand.vmem [shape: bf16[2,64,4], index: 0, kind: input, shape index: {}]
  %s1 = inlined_call_operand.vmem [shape: bf16[2,64,4], index: 1, kind: input, shape index: {}]
  %s2 = inlined_call_operand.vmem [shape: bf16[4,256], index: 2, kind: input, shape index: {}]
  %s3 = inlined_call_operand.vmem [shape: f32[1,128], index: 3, kind: input, shape index: {}]
  %s4 = inlined_call_operand.hbm [shape: f32[2,512], index: 4, kind: output, shape index: {}]
  %s5 = sld [smem:[#allocation0]]
  $region26: #{tpu_custom_call.1} parent=0
    _
  %s7 = ssub.s32 1, %s5
  %s8 = scalar_select 0, %s7, %s5
  $region1: #{tpu_custom_call.1} parent=0
    #allocation2 [shape = 'u8[4096]{0}', space=vmem, size = 0x1000, scoped, tag = 'output window, operand 0, single buffered']
    #allocation3 [shape = 's32[1]{0}', space=sflag, size = 0x4, scoped, tag = 'scoped memory for tpu_custom_call.1']
    %9 = vsyncpa [#allocation3], 0
    // Predicated region
    $region2: #{tpu_custom_call.1} parent=1 // pred_check
      _
    $region3: #{tpu_custom_call.1} parent=1 // pred_check_branch
      %11 = sbr.rel (0) target = $region5
    $region4: #{tpu_custom_call.1} parent=1 // pred_region
      _
    $region5: #{tpu_custom_call.1} parent=1 // pred_fallthru
      _
    // Predicated region
    $region6: #{tpu_custom_call.1} parent=1 // pred_check
      _
    $region7: #{tpu_custom_call.1} parent=1 // pred_check_branch
      %13 = sbr.rel (0) target = $region9
    $region8: #{tpu_custom_call.1} parent=1 // pred_region
      _
    $region9: #{tpu_custom_call.1} parent=1 // pred_fallthru
      _
    // Predicated region
    $region10: #{tpu_custom_call.1} parent=1 // pred_check
      _
    $region11: #{tpu_custom_call.1} parent=1 // pred_check_branch
      %15 = sbr.rel (0) target = $region13
    $region12: #{tpu_custom_call.1} parent=1 // pred_region
      _
    $region13: #{tpu_custom_call.1} parent=1 // pred_fallthru
      _
    // Predicated region
    $region14: #{tpu_custom_call.1} parent=1 // pred_check
      _
    $region15: #{tpu_custom_call.1} parent=1 // pred_check_branch
      %17 = sbr.rel (0) target = $region17
    $region16: #{tpu_custom_call.1} parent=1 // pred_region
      _
    $region17: #{tpu_custom_call.1} parent=1 // pred_fallthru
      _
    %v19 = vld [vmem:[%s2] sm:$0xf]
    %v20 = vld [vmem:[%s0] sm:$0xf]
    %v21 = vld [vmem:[%s0 + $0x4] sm:$0xf]
    %v22 = vld [vmem:[%s0 + $0x8] sm:$0xf]
    %v23 = vld [vmem:[%s0 + $0xc] sm:$0xf]
    %v24 = vld [vmem:[%s0 + $0x10] sm:$0xf]
    %v25 = vld [vmem:[%s0 + $0x14] sm:$0xf]
    %v26 = vld [vmem:[%s0 + $0x18] sm:$0xf]
    %v27 = vld [vmem:[%s0 + $0x1c] sm:$0xf]
    %v28 = vld [vmem:[%s0 + $0x20] sm:$0xf]
    %v29 = vld [vmem:[%s0 + $0x24] sm:$0xf]
    %v30 = vld [vmem:[%s0 + $0x28] sm:$0xf]
    %v31 = vld [vmem:[%s0 + $0x2c] sm:$0xf]
    %v32 = vld [vmem:[%s0 + $0x30] sm:$0xf]
    %v33 = vld [vmem:[%s0 + $0x34] sm:$0xf]
    %v34 = vld [vmem:[%s0 + $0x38] sm:$0xf]
    %v35 = vld [vmem:[%s0 + $0x3c] sm:$0xf]
    %v52 = vunpack.c.l.b16 %v20
    %v53 = vunpack.c.l.b16 %v21
    %v54 = vunpack.c.l.b16 %v22
    %v55 = vunpack.c.l.b16 %v23
    %v56 = vunpack.c.l.b16 %v24
    %v57 = vunpack.c.l.b16 %v25
    %v58 = vunpack.c.l.b16 %v26
    %v59 = vunpack.c.l.b16 %v27
    %v60 = vunpack.c.l.b16 %v28
    %v61 = vunpack.c.l.b16 %v29
    %v62 = vunpack.c.l.b16 %v30
    %v63 = vunpack.c.l.b16 %v31
    %v64 = vunpack.c.l.b16 %v32
    %v65 = vunpack.c.l.b16 %v33
    %v66 = vunpack.c.l.b16 %v34
    %v67 = vunpack.c.l.b16 %v35
    %v68 = vpack.c.b16 %v53, %v52
    %v69 = vpack.c.b16 %v55, %v54
    %v70 = vpack.c.b16 %v57, %v56
    %v71 = vpack.c.b16 %v59, %v58
    %v72 = vpack.c.b16 %v61, %v60
    %v73 = vpack.c.b16 %v63, %v62
    %v74 = vpack.c.b16 %v65, %v64
    %v75 = vpack.c.b16 %v67, %v66
    %v78 = vunpack.c.l.s4 1983009808
    %v79 = vunpack.c.0.s8 %v78
    %v80 = vlaneseq
    %v81 = vshrl.u32 %v80, 7
    %v82 = vsub.s32 %v79, %v81
    %v83 = vrot.slane %v19, %v82
    %v84 = vcombine.high %v83, %v83
    %vm85 = vcmask 31744
    %v87 = vsel %vm85, %v68, 0
    %v90 = vsel %vm85, %v69, 0
    %v93 = vsel %vm85, %v70, 0
    %v96 = vsel %vm85, %v71, 0
    %v99 = vsel %vm85, %v72, 0
    %v102 = vsel %vm85, %v73, 0
    %v105 = vsel %vm85, %v74, 0
    %v108 = vsel %vm85, %v75, 0
    %vm110 = vcmask 1041408
    %v112 = vsel %vm110, %v83, 0
    %v115 = vsel %vm110, %v84, 0
    %117 = vmatprep.subr.bf16.mxu0 %v115
    %118 = vmatpush1.bf16.msra.mxu0 %v112
    %119 = vmatprep.subr.bf16.mxu0 0
    %120 = vmatpush1.bf16.msra.mxu0 0
    %121 = vmatprep.subr.bf16.mxu0 0
    %122 = vmatpush1.bf16.msra.mxu0 0
    %123 = vmatprep.subr.bf16.mxu0 0
    %124 = vmatpush1.bf16.msra.mxu0 0
    %125 = vmatprep.subr.bf16.mxu0 0
    %126 = vmatpush1.bf16.msra.mxu0 0
    %127 = vmatprep.subr.bf16.mxu0 0
    %128 = vmatpush1.bf16.msra.mxu0 0
    %129 = vmatprep.subr.bf16.mxu0 0
    %130 = vmatpush1.bf16.msra.mxu0 0
    %131 = vmatprep.subr.bf16.mxu0 0
    %132 = vmatpush1.bf16.msra.mxu0 0
    %133 = vmatprep.subr.bf16.mxu0 0
    %134 = vmatpush1.bf16.msra.mxu0 0
    %135 = vmatprep.subr.bf16.mxu0 0
    %136 = vmatpush1.bf16.msra.mxu0 0
    %137 = vmatprep.subr.bf16.mxu0 0
    %138 = vmatpush1.bf16.msra.mxu0 0
    %139 = vmatprep.subr.bf16.mxu0 0
    %140 = vmatpush1.bf16.msra.mxu0 0
    %141 = vmatprep.subr.bf16.mxu0 0
    %142 = vmatpush1.bf16.msra.mxu0 0
    %143 = vmatprep.subr.bf16.mxu0 0
    %144 = vmatpush1.bf16.msra.mxu0 0
    %145 = vmatprep.subr.bf16.mxu0 0
    %146 = vmatpush1.bf16.msra.mxu0 0
    %147 = vmatprep.subr.bf16.mxu0 0
    %148 = vmatpush1.bf16.msra.mxu0 0
    %149 = vmatprep.mubr.bf16.mxu0 0
    %150 = vmatmul.mubr.bf16.gmra.mrb[0].mxu0 %v87
    %v151 = vpop.f32.mrb[0].mxu0
    %v152 = vadd.f32 0.0, %v151
    %v153 = vpop.f32.mrb[0].mxu0
    %v154 = vadd.f32 0.0, %v153
    %v155 = vpop.f32.mrb[0].mxu0
    %v156 = vadd.f32 0.0, %v155
    %v157 = vpop.f32.mrb[0].mxu0
    %v158 = vadd.f32 0.0, %v157
    %159 = vmatprep.mubr.bf16.mxu0 0
    %160 = vmatmul.mubr.bf16.gmra.mrb[0].mxu0 %v90
    %v161 = vpop.f32.mrb[0].mxu0
    %v162 = vadd.f32 0.0, %v161
    %v163 = vpop.f32.mrb[0].mxu0
    %v164 = vadd.f32 0.0, %v163
    %v165 = vpop.f32.mrb[0].mxu0
    %v166 = vadd.f32 0.0, %v165
    %v167 = vpop.f32.mrb[0].mxu0
    %v168 = vadd.f32 0.0, %v167
    %169 = vmatprep.mubr.bf16.mxu0 0
    %170 = vmatmul.mubr.bf16.gmra.mrb[0].mxu0 %v93
    %v171 = vpop.f32.mrb[0].mxu0
    %v172 = vadd.f32 0.0, %v171
    %v173 = vpop.f32.mrb[0].mxu0
    %v174 = vadd.f32 0.0, %v173
    %v175 = vpop.f32.mrb[0].mxu0
    %v176 = vadd.f32 0.0, %v175
    %v177 = vpop.f32.mrb[0].mxu0
    %v178 = vadd.f32 0.0, %v177
    %179 = vmatprep.mubr.bf16.mxu0 0
    %180 = vmatmul.mubr.bf16.gmra.mrb[0].mxu0 %v96
    %v181 = vpop.f32.mrb[0].mxu0
    %v182 = vadd.f32 0.0, %v181
    %v183 = vpop.f32.mrb[0].mxu0
    %v184 = vadd.f32 0.0, %v183
    %v185 = vpop.f32.mrb[0].mxu0
    %v186 = vadd.f32 0.0, %v185
    %v187 = vpop.f32.mrb[0].mxu0
    %v188 = vadd.f32 0.0, %v187
    %189 = vmatprep.mubr.bf16.mxu0 0
    %190 = vmatmul.mubr.bf16.gmra.mrb[0].mxu0 %v99
    %v191 = vpop.f32.mrb[0].mxu0
    %v192 = vadd.f32 0.0, %v191
    %v193 = vpop.f32.mrb[0].mxu0
    %v194 = vadd.f32 0.0, %v193
    %v195 = vpop.f32.mrb[0].mxu0
    %v196 = vadd.f32 0.0, %v195
    %v197 = vpop.f32.mrb[0].mxu0
    %v198 = vadd.f32 0.0, %v197
    %199 = vmatprep.mubr.bf16.mxu0 0
    %200 = vmatmul.mubr.bf16.gmra.mrb[0].mxu0 %v102
    %v201 = vpop.f32.mrb[0].mxu0
    %v202 = vadd.f32 0.0, %v201
    %v203 = vpop.f32.mrb[0].mxu0
    %v204 = vadd.f32 0.0, %v203
    %v205 = vpop.f32.mrb[0].mxu0
    %v206 = vadd.f32 0.0, %v205
    %v207 = vpop.f32.mrb[0].mxu0
    %v208 = vadd.f32 0.0, %v207
    %209 = vmatprep.mubr.bf16.mxu0 0
    %210 = vmatmul.mubr.bf16.gmra.mrb[0].mxu0 %v105
    %v211 = vpop.f32.mrb[0].mxu0
    %v212 = vadd.f32 0.0, %v211
    %v213 = vpop.f32.mrb[0].mxu0
    %v214 = vadd.f32 0.0, %v213
    %v215 = vpop.f32.mrb[0].mxu0
    %v216 = vadd.f32 0.0, %v215
    %v217 = vpop.f32.mrb[0].mxu0
    %v218 = vadd.f32 0.0, %v217
    %219 = vmatprep.mubr.bf16.mxu0 0
    %220 = vmatmul.mubr.bf16.gmra.mrb[0].mxu0 %v108
    %v221 = vpop.f32.mrb[0].mxu0
    %v222 = vadd.f32 0.0, %v221
    %v223 = vpop.f32.mrb[0].mxu0
    %v224 = vadd.f32 0.0, %v223
    %v225 = vpop.f32.mrb[0].mxu0
    %v226 = vadd.f32 0.0, %v225
    %v227 = vpop.f32.mrb[0].mxu0
    %v228 = vadd.f32 0.0, %v227
    %229 = vdwg.mxu0
    %v230 = vld [vmem:[%s1] sm:$0xf]
    %v231 = vld [vmem:[%s1 + $0x4] sm:$0xf]
    %v232 = vld [vmem:[%s1 + $0x8] sm:$0xf]
    %v233 = vld [vmem:[%s1 + $0xc] sm:$0xf]
    %v234 = vld [vmem:[%s1 + $0x10] sm:$0xf]
    %v235 = vld [vmem:[%s1 + $0x14] sm:$0xf]
    %v236 = vld [vmem:[%s1 + $0x18] sm:$0xf]
    %v237 = vld [vmem:[%s1 + $0x1c] sm:$0xf]
    %v238 = vld [vmem:[%s1 + $0x20] sm:$0xf]
    %v239 = vld [vmem:[%s1 + $0x24] sm:$0xf]
    %v240 = vld [vmem:[%s1 + $0x28] sm:$0xf]
    %v241 = vld [vmem:[%s1 + $0x2c] sm:$0xf]
    %v242 = vld [vmem:[%s1 + $0x30] sm:$0xf]
    %v243 = vld [vmem:[%s1 + $0x34] sm:$0xf]
    %v244 = vld [vmem:[%s1 + $0x38] sm:$0xf]
    %v245 = vld [vmem:[%s1 + $0x3c] sm:$0xf]
    %v262 = vunpack.c.l.b16 %v230
    %v263 = vunpack.c.l.b16 %v231
    %v264 = vunpack.c.l.b16 %v232
    %v265 = vunpack.c.l.b16 %v233
    %v266 = vunpack.c.l.b16 %v234
    %v267 = vunpack.c.l.b16 %v235
    %v268 = vunpack.c.l.b16 %v236
    %v269 = vunpack.c.l.b16 %v237
    %v270 = vunpack.c.l.b16 %v238
    %v271 = vunpack.c.l.b16 %v239
    %v272 = vunpack.c.l.b16 %v240
    %v273 = vunpack.c.l.b16 %v241
    %v274 = vunpack.c.l.b16 %v242
    %v275 = vunpack.c.l.b16 %v243
    %v276 = vunpack.c.l.b16 %v244
    %v277 = vunpack.c.l.b16 %v245
    %v278 = vpack.c.b16 %v263, %v262
    %v279 = vpack.c.b16 %v265, %v264
    %v280 = vpack.c.b16 %v267, %v266
    %v281 = vpack.c.b16 %v269, %v268
    %v282 = vpack.c.b16 %v271, %v270
    %v283 = vpack.c.b16 %v273, %v272
    %v284 = vpack.c.b16 %v275, %v274
    %v285 = vpack.c.b16 %v277, %v276
    %v287 = vsel %vm85, %v278, 0
    %v290 = vsel %vm85, %v279, 0
    %v293 = vsel %vm85, %v280, 0
    %v296 = vsel %vm85, %v281, 0
    %v299 = vsel %vm85, %v282, 0
    %v302 = vsel %vm85, %v283, 0
    %v305 = vsel %vm85, %v284, 0
    %v308 = vsel %vm85, %v285, 0
    %310 = vmatprep.subr.bf16.mxu0 %v115
    %311 = vmatpush1.bf16.msra.mxu0 %v112
    %312 = vmatprep.subr.bf16.mxu0 0
    %313 = vmatpush1.bf16.msra.mxu0 0
    %314 = vmatprep.subr.bf16.mxu0 0
    %315 = vmatpush1.bf16.msra.mxu0 0
    %316 = vmatprep.subr.bf16.mxu0 0
    %317 = vmatpush1.bf16.msra.mxu0 0
    %318 = vmatprep.subr.bf16.mxu0 0
    %319 = vmatpush1.bf16.msra.mxu0 0
    %320 = vmatprep.subr.bf16.mxu0 0
    %321 = vmatpush1.bf16.msra.mxu0 0
    %322 = vmatprep.subr.bf16.mxu0 0
    %323 = vmatpush1.bf16.msra.mxu0 0
    %324 = vmatprep.subr.bf16.mxu0 0
    %325 = vmatpush1.bf16.msra.mxu0 0
    %326 = vmatprep.subr.bf16.mxu0 0
    %327 = vmatpush1.bf16.msra.mxu0 0
    %328 = vmatprep.subr.bf16.mxu0 0
    %329 = vmatpush1.bf16.msra.mxu0 0
    %330 = vmatprep.subr.bf16.mxu0 0
    %331 = vmatpush1.bf16.msra.mxu0 0
    %332 = vmatprep.subr.bf16.mxu0 0
    %333 = vmatpush1.bf16.msra.mxu0 0
    %334 = vmatprep.subr.bf16.mxu0 0
    %335 = vmatpush1.bf16.msra.mxu0 0
    %336 = vmatprep.subr.bf16.mxu0 0
    %337 = vmatpush1.bf16.msra.mxu0 0
    %338 = vmatprep.subr.bf16.mxu0 0
    %339 = vmatpush1.bf16.msra.mxu0 0
    %340 = vmatprep.subr.bf16.mxu0 0
    %341 = vmatpush1.bf16.msra.mxu0 0
    %342 = vmatprep.mubr.bf16.mxu0 0
    %343 = vmatmul.mubr.bf16.gmra.mrb[0].mxu0 %v287
    %v344 = vpop.f32.mrb[0].mxu0
    %v345 = vadd.f32 0.0, %v344
    %v346 = vpop.f32.mrb[0].mxu0
    %v347 = vadd.f32 0.0, %v346
    %v348 = vpop.f32.mrb[0].mxu0
    %v349 = vadd.f32 0.0, %v348
    %v350 = vpop.f32.mrb[0].mxu0
    %v351 = vadd.f32 0.0, %v350
    %352 = vmatprep.mubr.bf16.mxu0 0
    %353 = vmatmul.mubr.bf16.gmra.mrb[0].mxu0 %v290
    %v354 = vpop.f32.mrb[0].mxu0
    %v355 = vadd.f32 0.0, %v354
    %v356 = vpop.f32.mrb[0].mxu0
    %v357 = vadd.f32 0.0, %v356
    %v358 = vpop.f32.mrb[0].mxu0
    %v359 = vadd.f32 0.0, %v358
    %v360 = vpop.f32.mrb[0].mxu0
    %v361 = vadd.f32 0.0, %v360
    %362 = vmatprep.mubr.bf16.mxu0 0
    %363 = vmatmul.mubr.bf16.gmra.mrb[0].mxu0 %v293
    %v364 = vpop.f32.mrb[0].mxu0
    %v365 = vadd.f32 0.0, %v364
    %v366 = vpop.f32.mrb[0].mxu0
    %v367 = vadd.f32 0.0, %v366
    %v368 = vpop.f32.mrb[0].mxu0
    %v369 = vadd.f32 0.0, %v368
    %v370 = vpop.f32.mrb[0].mxu0
    %v371 = vadd.f32 0.0, %v370
    %372 = vmatprep.mubr.bf16.mxu0 0
    %373 = vmatmul.mubr.bf16.gmra.mrb[0].mxu0 %v296
    %v374 = vpop.f32.mrb[0].mxu0
    %v375 = vadd.f32 0.0, %v374
    %v376 = vpop.f32.mrb[0].mxu0
    %v377 = vadd.f32 0.0, %v376
    %v378 = vpop.f32.mrb[0].mxu0
    %v379 = vadd.f32 0.0, %v378
    %v380 = vpop.f32.mrb[0].mxu0
    %v381 = vadd.f32 0.0, %v380
    %382 = vmatprep.mubr.bf16.mxu0 0
    %383 = vmatmul.mubr.bf16.gmra.mrb[0].mxu0 %v299
    %v384 = vpop.f32.mrb[0].mxu0
    %v385 = vadd.f32 0.0, %v384
    %v386 = vpop.f32.mrb[0].mxu0
    %v387 = vadd.f32 0.0, %v386
    %v388 = vpop.f32.mrb[0].mxu0
    %v389 = vadd.f32 0.0, %v388
    %v390 = vpop.f32.mrb[0].mxu0
    %v391 = vadd.f32 0.0, %v390
    %392 = vmatprep.mubr.bf16.mxu0 0
    %393 = vmatmul.mubr.bf16.gmra.mrb[0].mxu0 %v302
    %v394 = vpop.f32.mrb[0].mxu0
    %v395 = vadd.f32 0.0, %v394
    %v396 = vpop.f32.mrb[0].mxu0
    %v397 = vadd.f32 0.0, %v396
    %v398 = vpop.f32.mrb[0].mxu0
    %v399 = vadd.f32 0.0, %v398
    %v400 = vpop.f32.mrb[0].mxu0
    %v401 = vadd.f32 0.0, %v400
    %402 = vmatprep.mubr.bf16.mxu0 0
    %403 = vmatmul.mubr.bf16.gmra.mrb[0].mxu0 %v305
    %v404 = vpop.f32.mrb[0].mxu0
    %v405 = vadd.f32 0.0, %v404
    %v406 = vpop.f32.mrb[0].mxu0
    %v407 = vadd.f32 0.0, %v406
    %v408 = vpop.f32.mrb[0].mxu0
    %v409 = vadd.f32 0.0, %v408
    %v410 = vpop.f32.mrb[0].mxu0
    %v411 = vadd.f32 0.0, %v410
    %412 = vmatprep.mubr.bf16.mxu0 0
    %413 = vmatmul.mubr.bf16.gmra.mrb[0].mxu0 %v308
    %v414 = vpop.f32.mrb[0].mxu0
    %v415 = vadd.f32 0.0, %v414
    %v416 = vpop.f32.mrb[0].mxu0
    %v417 = vadd.f32 0.0, %v416
    %v418 = vpop.f32.mrb[0].mxu0
    %v419 = vadd.f32 0.0, %v418
    %v420 = vpop.f32.mrb[0].mxu0
    %v421 = vadd.f32 0.0, %v420
    %422 = vdwg.mxu0
    %v423 = vld [vmem:[%s3] sm:$0x1]
    %v424 = vsub.f32 %v154, %v347
    %v425 = vsub.f32 %v158, %v351
    %v426 = vsub.f32 %v164, %v357
    %v427 = vsub.f32 %v168, %v361
    %v428 = vsub.f32 %v174, %v367
    %v429 = vsub.f32 %v178, %v371
    %v430 = vsub.f32 %v184, %v377
    %v431 = vsub.f32 %v188, %v381
    %v432 = vsub.f32 %v194, %v387
    %v433 = vsub.f32 %v198, %v391
    %v434 = vsub.f32 %v204, %v397
    %v435 = vsub.f32 %v208, %v401
    %v436 = vsub.f32 %v214, %v407
    %v437 = vsub.f32 %v218, %v411
    %v438 = vsub.f32 %v224, %v417
    %v439 = vsub.f32 %v228, %v421
    %v440 = vand.u32 2147483647, %v424
    %v441 = vand.u32 2147483647, %v425
    %v442 = vand.u32 2147483647, %v426
    %v443 = vand.u32 2147483647, %v427
    %v444 = vand.u32 2147483647, %v428
    %v445 = vand.u32 2147483647, %v429
    %v446 = vand.u32 2147483647, %v430
    %v447 = vand.u32 2147483647, %v431
    %v448 = vand.u32 2147483647, %v432
    %v449 = vand.u32 2147483647, %v433
    %v450 = vand.u32 2147483647, %v434
    %v451 = vand.u32 2147483647, %v435
    %v452 = vand.u32 2147483647, %v436
    %v453 = vand.u32 2147483647, %v437
    %v454 = vand.u32 2147483647, %v438
    %v455 = vand.u32 2147483647, %v439
    %v456 = vadd.f32 %v440, %v441
    %v457 = vadd.f32 %v456, %v442
    %v458 = vadd.f32 %v457, %v443
    %v459 = vadd.f32 %v458, %v444
    %v460 = vadd.f32 %v459, %v445
    %v461 = vadd.f32 %v460, %v446
    %v462 = vadd.f32 %v461, %v447
    %v463 = vrot.slane %v462, 4
    %v464 = vadd.f32 %v462, %v463
    %v465 = vrot.slane %v464, 2
    %v466 = vadd.f32 %v464, %v465
    %v467 = vrot.slane %v466, 1
    %v468 = vadd.f32 %v466, %v467
    %v469 = vadd.f32 %v448, %v449
    %v470 = vadd.f32 %v469, %v450
    %v471 = vadd.f32 %v470, %v451
    %v472 = vadd.f32 %v471, %v452
    %v473 = vadd.f32 %v472, %v453
    %v474 = vadd.f32 %v473, %v454
    %v475 = vadd.f32 %v474, %v455
    %v476 = vrot.slane %v475, 4
    %v477 = vadd.f32 %v475, %v476
    %v478 = vrot.slane %v477, 2
    %v479 = vadd.f32 %v477, %v478
    %v480 = vrot.slane %v479, 1
    %v481 = vadd.f32 %v479, %v480
    %v482 = vmul.f32 %v468, 0.020408163
    %v483 = vmul.f32 %v481, 0.020408163
    %v485 = vlaneseq
    %v486 = vshrl.u32 %v485, 7
    %v487 = vsub.s32 0, %v486
    %v488 = vrot.slane %v423, %v487
    %vm492 = vcmask 1041409
    %v493 = vsel %vm492, %v483, %v482
    %v495 = vmul.f32 %v488, %v493
    %v496 = vadd.f32 %v152, %v156
    %v497 = vadd.f32 %v496, %v162
    %v498 = vadd.f32 %v497, %v166
    %v499 = vadd.f32 %v498, %v172
    %v500 = vadd.f32 %v499, %v176
    %v501 = vadd.f32 %v500, %v182
    %v502 = vadd.f32 %v501, %v186
    %v503 = vrot.slane %v502, 4
    %v504 = vadd.f32 %v502, %v503
    %v505 = vrot.slane %v504, 2
    %v506 = vadd.f32 %v504, %v505
    %v507 = vrot.slane %v506, 1
    %v508 = vadd.f32 %v506, %v507
    %v509 = vadd.f32 %v192, %v196
    %v510 = vadd.f32 %v509, %v202
    %v511 = vadd.f32 %v510, %v206
    %v512 = vadd.f32 %v511, %v212
    %v513 = vadd.f32 %v512, %v216
    %v514 = vadd.f32 %v513, %v222
    %v515 = vadd.f32 %v514, %v226
    %v516 = vrot.slane %v515, 4
    %v517 = vadd.f32 %v515, %v516
    %v518 = vrot.slane %v517, 2
    %v519 = vadd.f32 %v517, %v518
    %v520 = vrot.slane %v519, 1
    %v521 = vadd.f32 %v519, %v520
    %v522 = vmul.f32 %v508, 0.020408163
    %v523 = vmul.f32 %v521, 0.020408163
    %v524 = vadd.f32 %v522, %v488
    %v525 = vadd.f32 %v523, %v488
    %v526 = vadd.f32 %v345, %v349
    %v527 = vadd.f32 %v526, %v355
    %v528 = vadd.f32 %v527, %v359
    %v529 = vadd.f32 %v528, %v365
    %v530 = vadd.f32 %v529, %v369
    %v531 = vadd.f32 %v530, %v375
    %v532 = vadd.f32 %v531, %v379
    %v533 = vrot.slane %v532, 4
    %v534 = vadd.f32 %v532, %v533
    %v535 = vrot.slane %v534, 2
    %v536 = vadd.f32 %v534, %v535
    %v537 = vrot.slane %v536, 1
    %v538 = vadd.f32 %v536, %v537
    %v539 = vadd.f32 %v385, %v389
    %v540 = vadd.f32 %v539, %v395
    %v541 = vadd.f32 %v540, %v399
    %v542 = vadd.f32 %v541, %v405
    %v543 = vadd.f32 %v542, %v409
    %v544 = vadd.f32 %v543, %v415
    %v545 = vadd.f32 %v544, %v419
    %v546 = vrot.slane %v545, 4
    %v547 = vadd.f32 %v545, %v546
    %v548 = vrot.slane %v547, 2
    %v549 = vadd.f32 %v547, %v548
    %v550 = vrot.slane %v549, 1
    %v551 = vadd.f32 %v549, %v550
    %v552 = vmul.f32 %v538, 0.020408163
    %v553 = vmul.f32 %v551, 0.020408163
    %v554 = vadd.f32 %v552, %v488
    %v555 = vadd.f32 %v553, %v488
    %v556 = vmul.f32 %v152, %v440
    %v557 = vmul.f32 %v156, %v441
    %v558 = vmul.f32 %v162, %v442
    %v559 = vmul.f32 %v166, %v443
    %v560 = vmul.f32 %v172, %v444
    %v561 = vmul.f32 %v176, %v445
    %v562 = vmul.f32 %v182, %v446
    %v563 = vmul.f32 %v186, %v447
    %v564 = vmul.f32 %v192, %v448
    %v565 = vmul.f32 %v196, %v449
    %v566 = vmul.f32 %v202, %v450
    %v567 = vmul.f32 %v206, %v451
    %v568 = vmul.f32 %v212, %v452
    %v569 = vmul.f32 %v216, %v453
    %v570 = vmul.f32 %v222, %v454
    %v571 = vmul.f32 %v226, %v455
    %v572 = vadd.f32 %v556, %v557
    %v573 = vadd.f32 %v572, %v558
    %v574 = vadd.f32 %v573, %v559
    %v575 = vadd.f32 %v574, %v560
    %v576 = vadd.f32 %v575, %v561
    %v577 = vadd.f32 %v576, %v562
    %v578 = vadd.f32 %v577, %v563
    %v579 = vrot.slane %v578, 4
    %v580 = vadd.f32 %v578, %v579
    %v581 = vrot.slane %v580, 2
    %v582 = vadd.f32 %v580, %v581
    %v583 = vrot.slane %v582, 1
    %v584 = vadd.f32 %v582, %v583
    %v585 = vadd.f32 %v564, %v565
    %v586 = vadd.f32 %v585, %v566
    %v587 = vadd.f32 %v586, %v567
    %v588 = vadd.f32 %v587, %v568
    %v589 = vadd.f32 %v588, %v569
    %v590 = vadd.f32 %v589, %v570
    %v591 = vadd.f32 %v590, %v571
    %v592 = vrot.slane %v591, 4
    %v593 = vadd.f32 %v591, %v592
    %v594 = vrot.slane %v593, 2
    %v595 = vadd.f32 %v593, %v594
    %v596 = vrot.slane %v595, 1
    %v597 = vadd.f32 %v595, %v596
    %v598 = vmul.f32 %v584, 0.020408163
    %v599 = vmul.f32 %v597, 0.020408163
    %v601 = vrot.slane %v495, 1
    %v604 = vadd.f32 %v598, %v495
    %v605 = vadd.f32 %v599, %v601
    %v606 = vmul.f32 %v345, %v440
    %v607 = vmul.f32 %v349, %v441
    %v608 = vmul.f32 %v355, %v442
    %v609 = vmul.f32 %v359, %v443
    %v610 = vmul.f32 %v365, %v444
    %v611 = vmul.f32 %v369, %v445
    %v612 = vmul.f32 %v375, %v446
    %v613 = vmul.f32 %v379, %v447
    %v614 = vmul.f32 %v385, %v448
    %v615 = vmul.f32 %v389, %v449
    %v616 = vmul.f32 %v395, %v450
    %v617 = vmul.f32 %v399, %v451
    %v618 = vmul.f32 %v405, %v452
    %v619 = vmul.f32 %v409, %v453
    %v620 = vmul.f32 %v415, %v454
    %v621 = vmul.f32 %v419, %v455
    %v622 = vadd.f32 %v606, %v607
    %v623 = vadd.f32 %v622, %v608
    %v624 = vadd.f32 %v623, %v609
    %v625 = vadd.f32 %v624, %v610
    %v626 = vadd.f32 %v625, %v611
    %v627 = vadd.f32 %v626, %v612
    %v628 = vadd.f32 %v627, %v613
    %v629 = vrot.slane %v628, 4
    %v630 = vadd.f32 %v628, %v629
    %v631 = vrot.slane %v630, 2
    %v632 = vadd.f32 %v630, %v631
    %v633 = vrot.slane %v632, 1
    %v634 = vadd.f32 %v632, %v633
    %v635 = vadd.f32 %v614, %v615
    %v636 = vadd.f32 %v635, %v616
    %v637 = vadd.f32 %v636, %v617
    %v638 = vadd.f32 %v637, %v618
    %v639 = vadd.f32 %v638, %v619
    %v640 = vadd.f32 %v639, %v620
    %v641 = vadd.f32 %v640, %v621
    %v642 = vrot.slane %v641, 4
    %v643 = vadd.f32 %v641, %v642
    %v644 = vrot.slane %v643, 2
    %v645 = vadd.f32 %v643, %v644
    %v646 = vrot.slane %v645, 1
    %v647 = vadd.f32 %v645, %v646
    %v648 = vmul.f32 %v634, 0.020408163
    %v649 = vmul.f32 %v647, 0.020408163
    %v650 = vadd.f32 %v648, %v495
    %v651 = vadd.f32 %v649, %v601
    %v654 = vrot.slane %v525, 7
    %v655 = vsel %vm492, %v654, %v524
    %v658 = vrot.slane %v555, 7
    %v659 = vsel %vm492, %v658, %v554
    %v662 = vrot.slane %v605, 7
    %v663 = vsel %vm492, %v662, %v604
    %v666 = vrot.slane %v651, 7
    %v667 = vsel %vm492, %v666, %v650
    %v668 = vcombine.low %v655, %v659
    %v669 = vcombine.low %v663, %v667
    %v671 = vunpack.c.l.s4 1983009808
    %v672 = vunpack.c.0.s8 %v671
    %v673 = vlaneseq
    %v674 = vshrl.u32 %v673, 7
    %v675 = vsub.s32 %v672, %v674
    %v676 = vrot.slane %v668, %v675
    %v678 = vunpack.c.l.s4 1983009808
    %v679 = vunpack.c.0.s8 %v678
    %v680 = vlaneseq
    %v681 = vshrl.u32 %v680, 7
    %v682 = vsub.s32 %v679, %v681
    %v683 = vrot.slane %v669, %v682
    %v684 = vcombine.low %v676, %v683
    %686 = vst [vmem:[#allocation2] sm:$0xff] %v684
    // Predicated region
    $region18: #{tpu_custom_call.1} parent=1 // pred_check
      _
    $region19: #{tpu_custom_call.1} parent=1 // pred_check_branch
      %688 = sbr.rel (0) target = $region21
    $region20: #{tpu_custom_call.1} parent=1 // pred_region
      %s690 = ssub.s32 128, 128
      %691 = vsyncadd [#allocation3], %s690
      %s693 = sshll.u32 [#allocation2], 4
      %s694 = int_to_ptr.vmem [resolvable:$true] %s693
      %696 = dma.vmem_to_hbm [thread:$0]  %s694, 128, %s4, [#allocation3]
    $region21: #{tpu_custom_call.1} parent=1 // pred_fallthru
      _
    // Predicated region
    $region22: #{tpu_custom_call.1} parent=1 // pred_check
      _
    $region23: #{tpu_custom_call.1} parent=1 // pred_check_branch
      %698 = sbr.rel (0) target = $region25
    $region24: #{tpu_custom_call.1} parent=1 // pred_region
      %699 = dma.done [#allocation3], 128
    $region25: #{tpu_custom_call.1} parent=1 // pred_fallthru
      _
    %700 = vsyncpa [#allocation3], 1

</llo_original>
